<compile_context>
chip_gen: v7x
topology: tpu7x:2x2x1
jax: 0.10.0
libtpu: 0.0.40
codegen_flags: <defaults>
</compile_context>

<pallas_src>
import numpy as np
import jax
import jax.numpy as jnp
from jax import lax
from jax.experimental import pallas as pl
from jax.experimental.pallas import tpu as pltpu


# ------------------------------ Pallas kernel ------------------------------ #

def _make_c3_kernel(n_blocks, H, W, HW, c_, c2, lpad):
    """Build the fused C3 kernel for one image per grid step."""

    def mm_bias_silu(w, x, b):
        # (1x1 conv with BN scale pre-folded into w) + bias + SiLU
        y = jnp.dot(w, x, preferred_element_type=jnp.float32) + b
        return y * jax.nn.sigmoid(y)

    def kernel(x_ref, w12_ref, b12_ref, w3_ref, b3_ref, *rest):
        m_refs = rest[:4 * n_blocks]          # per-bottleneck (w1, b1, wk, b2)
        out_ref = rest[4 * n_blocks]
        pad_ref = rest[4 * n_blocks + 1]      # VMEM staging buf for 3x3 taps
        cat_ref = rest[4 * n_blocks + 2]      # VMEM slab for [h ; y2] -> cv3

        x = x_ref[0]                                        # [C1, HW]

        # --- fused C3.cv1 + C3.cv2 stem: ONE matmul, ONE bias+SiLU pass -----
        y12 = mm_bias_silu(w12_ref[...], x, b12_ref[...])   # [2c_, HW]
        # Park the stacked stem output in VMEM: the y2 half is not needed
        # until cv3, so it should not stay live in vregs across the tap dots.
        cat_ref[...] = y12
        h = y12[:c_]                                        # [c_, HW] (m-branch)

        # Column-boundary masks for the +-1 lane taps (hoisted out of loops).
        col = lax.broadcasted_iota(jnp.int32, (1, HW), 1) % W
        not_left = (col != 0).astype(jnp.float32)           # dx == -1 invalid at w == 0
        not_right = (col != W - 1).astype(jnp.float32)      # dx == +1 invalid at w == W-1

        # Zero ONLY the halo regions (center is fully rewritten per block).
        # Deliberately executed every grid step (never program_id-gated): under
        # megacore "parallel" sharding each core must see initialized halos.
        pad_ref[:, :lpad] = jnp.zeros((c_, lpad), jnp.float32)
        pad_ref[:, lpad + HW:] = jnp.zeros((c_, lpad), jnp.float32)

        for blk in range(n_blocks):
            wm1 = m_refs[4 * blk][...]                      # [c_, c_]
            bm1 = m_refs[4 * blk + 1][...]                  # [c_, 1]
            wk_ref = m_refs[4 * blk + 2]                    # [9, c_, c_]
            bm2 = m_refs[4 * blk + 3][...]                  # [c_, 1]

            # Bottleneck.cv1 (1x1)
            t1 = mm_bias_silu(wm1, h, bm1)                  # [c_, HW]

            # Bottleneck.cv2 (3x3, pad=1): stage t1 into the zero-padded VMEM
            # buffer; accumulate shifted-tap matmuls grouped by dx so each
            # column mask is applied once per group AFTER the channel
            # contraction (per-lane masks commute with the dot).
            pad_ref[:, lpad:lpad + HW] = t1                 # lane-aligned store

            def tap(t):
                dy, dx = t // 3 - 1, t % 3 - 1
                start = lpad + dy * W + dx                  # static offset
                return pad_ref[:, start:start + HW]         # [c_, HW]

            def dot_t(t, v):
                return jnp.dot(wk_ref[t], v, preferred_element_type=jnp.float32)

            # dx == 0 group (no mask); center tap reuses t1 (no slice).
            acc_c = dot_t(1, tap(1))
            acc_c = acc_c + dot_t(4, t1)
            acc_c = acc_c + dot_t(7, tap(7))
            # dx == -1 group: one not_left multiply after the summed dots.
            acc_l = dot_t(0, tap(0)) + dot_t(3, tap(3)) + dot_t(6, tap(6))
            # dx == +1 group: one not_right multiply after the summed dots.
            acc_r = dot_t(2, tap(2)) + dot_t(5, tap(5)) + dot_t(8, tap(8))

            y = acc_c + not_left * acc_l + not_right * acc_r + bm2
            h = h + y * jax.nn.sigmoid(y)                   # SiLU + shortcut add

        # --- C3.cv3 on concat([h, y2], channel) as ONE K=2c_ matmul ---------
        cat_ref[:c_, :] = h                                 # overwrite m-branch half
        z = (jnp.dot(w3_ref[...], cat_ref[...], preferred_element_type=jnp.float32)
             + b3_ref[...])
        out_ref[0] = (z * jax.nn.sigmoid(z)).astype(out_ref.dtype)

    return kernel


# ------------------------------- JAX wrapper -------------------------------- #

def c3_forward(x_nchw, p):
    """C3.forward: cv3(cat(m(cv1(x)), cv2(x))).  Input/output NCHW like PyTorch."""
    N, C1, H, W = x_nchw.shape
    HW = H * W
    c_ = p["cv1_w"].shape[0]
    c2 = p["cv3_w"].shape[0]
    n_blocks = len(p["m"])
    lpad = pl.cdiv(W + 1, 128) * 128          # lane-aligned halo pad (>= W+1)

    x3 = x_nchw.reshape(N, C1, HW)            # NCHW -> [N, C, H*W] (no transpose)

    def fold1(w, s, b):                       # fold BN scale into the weight
        return w * s[:, None], b[:, None]

    w1f, b1 = fold1(p["cv1_w"], p["cv1_s"], p["cv1_b"])
    w2f, b2 = fold1(p["cv2_w"], p["cv2_s"], p["cv2_b"])
    w12 = jnp.concatenate([w1f, w2f], axis=0)          # fused cv1+cv2: [2c_, C1]
    b12 = jnp.concatenate([b1, b2], axis=0)            # [2c_, 1]
    w3f, b3 = fold1(p["cv3_w"], p["cv3_s"], p["cv3_b"])  # [c2, 2c_] single K=2c_ dot

    args = [x3, w12, b12, w3f, b3]
    for blk in p["m"]:
        wm1f, bm1 = fold1(blk["cv1_w"], blk["cv1_s"], blk["cv1_b"])
        # [co, ci, ky, kx] -> [t = ky*3+kx, co, ci], with BN scale folded in.
        wkf = (jnp.transpose(blk["cv2_w"], (2, 3, 0, 1)).reshape(9, c_, c_)
               * blk["cv2_s"][None, :, None])
        bm2 = blk["cv2_b"][:, None]
        args += [wm1f, bm1, wkf, bm2]

    def const_spec(a):
        return pl.BlockSpec(a.shape, lambda n, _nd=a.ndim: (0,) * _nd)

    in_specs = [pl.BlockSpec((1, C1, HW), lambda n: (n, 0, 0))]
    in_specs += [const_spec(a) for a in args[1:]]

    kernel = _make_c3_kernel(n_blocks, H, W, HW, c_, c2, lpad)

    out3 = pl.pallas_call(
        kernel,
        out_shape=jax.ShapeDtypeStruct((N, c2, HW), jnp.float32),
        grid=(N,),
        in_specs=in_specs,
        out_specs=pl.BlockSpec((1, c2, HW), lambda n: (n, 0, 0)),
        scratch_shapes=[pltpu.VMEM((c_, HW + 2 * lpad), jnp.float32),   # 3x3 staging
                        pltpu.VMEM((2 * c_, HW), jnp.float32)],          # [h ; y2] slab
        compiler_params=pltpu.CompilerParams(
            dimension_semantics=("parallel",),      # v7x: one image per TensorCore
            vmem_limit_bytes=32 * 1024 * 1024),
    )(*args)

    return out3.reshape(N, c2, H, W)


# ------------------------- deterministic parameters ------------------------ #

def init_c3_params(key, c1, c2, n=1, e=0.5):
    c_ = int(c2 * e)
    eps = 1e-5

    def bn_fold(co):  # eval-mode BN with fresh stats -> per-channel scale/bias
        gamma = jnp.ones((co,), jnp.float32)
        beta = jnp.zeros((co,), jnp.float32)
        mean = jnp.zeros((co,), jnp.float32)
        var = jnp.ones((co,), jnp.float32)
        s = gamma / jnp.sqrt(var + eps)
        return s, beta - mean * s

    keys = iter(jax.random.split(key, 3 + 2 * n))

    def w1x1(co, ci):  # stored as [Cout, Cin] (PyTorch [Cout,Cin,1,1] squeezed)
        return 0.1 * jax.random.normal(next(keys), (co, ci), jnp.float32)

    p = {}
    p["cv1_w"] = w1x1(c_, c1);      p["cv1_s"], p["cv1_b"] = bn_fold(c_)
    p["cv2_w"] = w1x1(c_, c1);      p["cv2_s"], p["cv2_b"] = bn_fold(c_)
    p["cv3_w"] = w1x1(c2, 2 * c_);  p["cv3_s"], p["cv3_b"] = bn_fold(c2)
    blocks = []
    for _ in range(n):
        blk = {}
        blk["cv1_w"] = w1x1(c_, c_)
        blk["cv1_s"], blk["cv1_b"] = bn_fold(c_)
        # stored as PyTorch OIHW: [Cout, Cin, 3, 3]
        blk["cv2_w"] = 0.1 * jax.random.normal(next(keys), (c_, c_, 3, 3), jnp.float32)
        blk["cv2_s"], blk["cv2_b"] = bn_fold(c_)
        blocks.append(blk)
    p["m"] = blocks
    return p


# ------------------------- pure-JAX reference check ------------------------ #

def _conv_bn_silu_ref(x, w_oihw, scale, bias, padding):
    y = lax.conv_general_dilated(
        x, w_oihw, window_strides=(1, 1), padding=padding,
        dimension_numbers=("NCHW", "OIHW", "NCHW"),
        precision=lax.Precision.HIGHEST)
    y = y * scale.reshape(1, -1, 1, 1) + bias.reshape(1, -1, 1, 1)
    return jax.nn.silu(y)


def c3_ref(x, p):
    def pw(w):  # [Cout, Cin] -> OIHW
        return w[:, :, None, None]
    z = [(0, 0), (0, 0)]
    y1 = _conv_bn_silu_ref(x, pw(p["cv1_w"]), p["cv1_s"], p["cv1_b"], z)
    y2 = _conv_bn_silu_ref(x, pw(p["cv2_w"]), p["cv2_s"], p["cv2_b"], z)
    h = y1
    for blk in p["m"]:
        b1 = _conv_bn_silu_ref(h, pw(blk["cv1_w"]), blk["cv1_s"], blk["cv1_b"], z)
        b2 = _conv_bn_silu_ref(b1, blk["cv2_w"], blk["cv2_s"], blk["cv2_b"],
                               [(1, 1), (1, 1)])
        h = h + b2
    cat = jnp.concatenate([h, y2], axis=1)
    return _conv_bn_silu_ref(cat, pw(p["cv3_w"]), p["cv3_s"], p["cv3_b"], z)


# ----------------------------------- main ----------------------------------- #

if __name__ == "__main__":
    key = jax.random.PRNGKey(0)
    kx, kp = jax.random.split(key)

    N, C1, H, W = 2, 4, 16, 16      # x in PyTorch NCHW convention
    C2 = 4                          # C3(c1=4, c2=4, n=1, shortcut=True)

    x = jax.random.normal(kx, (N, C1, H, W), jnp.float32)
    params = init_c3_params(kp, C1, C2, n=1, e=0.5)

    out = jax.block_until_ready(c3_forward(x, params))
    ref = jax.block_until_ready(c3_ref(x, params))
    assert out.shape == (N, C2, H, W) and out.dtype == jnp.float32
    np.testing.assert_allclose(np.asarray(out), np.asarray(ref), rtol=1e-2, atol=1e-2)

    print("KERNEL_OK")
</pallas_src>

<mosaic_0001>
module attributes {stable_mosaic.version = 11 : i64} {
  func.func @kernel(%arg0: i32, %arg1: memref<1x4x256xf32, #tpu.memory_space<vmem>>, %arg2: memref<4x4xf32, #tpu.memory_space<vmem>>, %arg3: memref<4x1xf32, #tpu.memory_space<vmem>>, %arg4: memref<4x4xf32, #tpu.memory_space<vmem>>, %arg5: memref<4x1xf32, #tpu.memory_space<vmem>>, %arg6: memref<2x2xf32, #tpu.memory_space<vmem>>, %arg7: memref<2x1xf32, #tpu.memory_space<vmem>>, %arg8: memref<9x2x2xf32, #tpu.memory_space<vmem>>, %arg9: memref<2x1xf32, #tpu.memory_space<vmem>>, %arg10: memref<1x4x256xf32, #tpu.memory_space<vmem>>, %arg11: memref<2x512xf32, #tpu.memory_space<vmem>>, %arg12: memref<4x256xf32, #tpu.memory_space<vmem>>) attributes {dimension_semantics = [#tpu.dimension_semantics<parallel>], iteration_bounds = array<i64: 2>, scalar_prefetch = 0 : i64, scratch_operands = 2 : i64, tpu.core_type = #tpu.core_type<tc>, window_params = [{transform_indices = @transform_0, window_bounds = array<i64: 1, 4, 256>}, {pipeline_mode = #tpu.pipeline_mode<synchronous>, transform_indices = @transform_1, window_bounds = array<i64: 4, 4>}, {pipeline_mode = #tpu.pipeline_mode<synchronous>, transform_indices = @transform_2, window_bounds = array<i64: 4, 1>}, {pipeline_mode = #tpu.pipeline_mode<synchronous>, transform_indices = @transform_3, window_bounds = array<i64: 4, 4>}, {pipeline_mode = #tpu.pipeline_mode<synchronous>, transform_indices = @transform_4, window_bounds = array<i64: 4, 1>}, {pipeline_mode = #tpu.pipeline_mode<synchronous>, transform_indices = @transform_5, window_bounds = array<i64: 2, 2>}, {pipeline_mode = #tpu.pipeline_mode<synchronous>, transform_indices = @transform_6, window_bounds = array<i64: 2, 1>}, {pipeline_mode = #tpu.pipeline_mode<synchronous>, transform_indices = @transform_7, window_bounds = array<i64: 9, 2, 2>}, {pipeline_mode = #tpu.pipeline_mode<synchronous>, transform_indices = @transform_8, window_bounds = array<i64: 2, 1>}, {transform_indices = @transform_9, window_bounds = array<i64: 1, 4, 256>}]} {
    %c0 = arith.constant 0 : index
    %c0_0 = arith.constant 0 : index
    %c0_1 = arith.constant 0 : index
    %0 = vector.load %arg1[%c0, %c0_0, %c0_1] : memref<1x4x256xf32, #tpu.memory_space<vmem>>, vector<1x4x256xf32>
    %1 = vector.shape_cast %0 : vector<1x4x256xf32> to vector<4x256xf32>
    %c0_2 = arith.constant 0 : index
    %c0_3 = arith.constant 0 : index
    %2 = vector.load %arg2[%c0_2, %c0_3] : memref<4x4xf32, #tpu.memory_space<vmem>>, vector<4x4xf32>
    %c0_4 = arith.constant 0 : index
    %c0_5 = arith.constant 0 : index
    %3 = vector.load %arg3[%c0_4, %c0_5] : memref<4x1xf32, #tpu.memory_space<vmem>>, vector<4x1xf32>
    %cst = arith.constant dense<0.000000e+00> : vector<4x256xf32>
    %4 = tpu.matmul %2, %1, %cst {dimension_numbers = #tpu.dot_dimension_numbers<[1], [0], [0], [1], [0, 0, 1, 1], [], []>} : vector<4x4xf32>, vector<4x256xf32>, vector<4x256xf32> -> vector<4x256xf32>
    %5 = vector.broadcast %3 : vector<4x1xf32> to vector<4x256xf32>
    %6 = arith.addf %4, %5 : vector<4x256xf32>
    %7 = arith.negf %6 : vector<4x256xf32>
    %8 = math.exp %7 : vector<4x256xf32>
    %cst_6 = arith.constant 1.000000e+00 : f32
    %9 = vector.broadcast %cst_6 : f32 to vector<4x256xf32>
    %10 = arith.addf %9, %8 : vector<4x256xf32>
    %11 = arith.divf %9, %10 : vector<4x256xf32>
    %12 = arith.mulf %6, %11 : vector<4x256xf32>
    %c0_7 = arith.constant 0 : index
    %c0_8 = arith.constant 0 : index
    %13 = vector.load %arg12[%c0_7, %c0_8] : memref<4x256xf32, #tpu.memory_space<vmem>>, vector<4x256xf32>
    tpu.vector_store %arg12[%c0_7, %c0_8], %12 {strides = array<i32>} : memref<4x256xf32, #tpu.memory_space<vmem>>, vector<4x256xf32>,
    %14 = vector.extract_strided_slice %12 {offsets = [0, 0], sizes = [2, 256], strides = [1, 1]} : vector<4x256xf32> to vector<2x256xf32>
    %15 = tpu.iota {dimensions = array<i32: 1>} : vector<1x256xi32>
    %c16_i32 = arith.constant 16 : i32
    %c0_i32 = arith.constant 0 : i32
    %16 = arith.cmpi eq, %c16_i32, %c0_i32 : i32
    %c1_i32 = arith.constant 1 : i32
    %17 = arith.select %16, %c1_i32, %c16_i32 : i32
    %18 = vector.broadcast %17 : i32 to vector<1x256xi32>
    %19 = arith.remsi %15, %18 : vector<1x256xi32>
    %c0_i32_9 = arith.constant 0 : i32
    %20 = vector.broadcast %c0_i32_9 : i32 to vector<1x256xi32>
    %21 = arith.cmpi ne, %19, %20 : vector<1x256xi32>
    %c0_i32_10 = arith.constant 0 : i32
    %22 = vector.broadcast %c0_i32_10 : i32 to vector<1x256xi32>
    %23 = arith.cmpi slt, %19, %22 : vector<1x256xi32>
    %c0_i32_11 = arith.constant 0 : i32
    %24 = arith.cmpi slt, %17, %c0_i32_11 : i32
    %25 = vector.broadcast %24 : i1 to vector<1x256xi1>
    %26 = vector.broadcast %25 : vector<1x256xi1> to vector<1x256xi1>
    %27 = arith.xori %23, %26 : vector<1x256xi1>
    %28 = arith.andi %27, %21 : vector<1x256xi1>
    %29 = vector.broadcast %17 : i32 to vector<1x256xi32>
    %30 = arith.addi %19, %29 : vector<1x256xi32>
    %31 = arith.select %28, %30, %19 : vector<1x256xi1>, vector<1x256xi32>
    %c0_i32_12 = arith.constant 0 : i32
    %32 = vector.broadcast %c0_i32_12 : i32 to vector<1x256xi32>
    %33 = arith.cmpi ne, %31, %32 : vector<1x256xi32>
    %34 = arith.extui %33 : vector<1x256xi1> to vector<1x256xi32>
    %35 = arith.sitofp %34 : vector<1x256xi32> to vector<1x256xf32>
    %c15_i32 = arith.constant 15 : i32
    %36 = vector.broadcast %c15_i32 : i32 to vector<1x256xi32>
    %37 = arith.cmpi ne, %31, %36 : vector<1x256xi32>
    %38 = arith.extui %37 : vector<1x256xi1> to vector<1x256xi32>
    %39 = arith.sitofp %38 : vector<1x256xi32> to vector<1x256xf32>
    %cst_13 = arith.constant 0.000000e+00 : f32
    %40 = vector.broadcast %cst_13 : f32 to vector<2x128xf32>
    %c0_14 = arith.constant 0 : index
    %c0_15 = arith.constant 0 : index
    %41 = vector.load %arg11[%c0_14, %c0_15] : memref<2x512xf32, #tpu.memory_space<vmem>>, vector<2x128xf32>
    tpu.vector_store %arg11[%c0_14, %c0_15], %40 {strides = array<i32>} : memref<2x512xf32, #tpu.memory_space<vmem>>, vector<2x128xf32>,
    %cst_16 = arith.constant 0.000000e+00 : f32
    %42 = vector.broadcast %cst_16 : f32 to vector<2x128xf32>
    %c0_17 = arith.constant 0 : index
    %c384 = arith.constant 384 : index
    %43 = vector.load %arg11[%c0_17, %c384] : memref<2x512xf32, #tpu.memory_space<vmem>>, vector<2x128xf32>
    tpu.vector_store %arg11[%c0_17, %c384], %42 {strides = array<i32>} : memref<2x512xf32, #tpu.memory_space<vmem>>, vector<2x128xf32>,
    %c0_18 = arith.constant 0 : index
    %c0_19 = arith.constant 0 : index
    %44 = vector.load %arg6[%c0_18, %c0_19] : memref<2x2xf32, #tpu.memory_space<vmem>>, vector<2x2xf32>
    %c0_20 = arith.constant 0 : index
    %c0_21 = arith.constant 0 : index
    %45 = vector.load %arg7[%c0_20, %c0_21] : memref<2x1xf32, #tpu.memory_space<vmem>>, vector<2x1xf32>
    %c0_22 = arith.constant 0 : index
    %c0_23 = arith.constant 0 : index
    %46 = vector.load %arg9[%c0_22, %c0_23] : memref<2x1xf32, #tpu.memory_space<vmem>>, vector<2x1xf32>
    %cst_24 = arith.constant dense<0.000000e+00> : vector<2x256xf32>
    %47 = tpu.matmul %44, %14, %cst_24 {dimension_numbers = #tpu.dot_dimension_numbers<[1], [0], [0], [1], [0, 0, 1, 1], [], []>} : vector<2x2xf32>, vector<2x256xf32>, vector<2x256xf32> -> vector<2x256xf32>
    %48 = vector.broadcast %45 : vector<2x1xf32> to vector<2x256xf32>
    %49 = arith.addf %47, %48 : vector<2x256xf32>
    %50 = arith.negf %49 : vector<2x256xf32>
    %51 = math.exp %50 : vector<2x256xf32>
    %cst_25 = arith.constant 1.000000e+00 : f32
    %52 = vector.broadcast %cst_25 : f32 to vector<2x256xf32>
    %53 = arith.addf %52, %51 : vector<2x256xf32>
    %54 = arith.divf %52, %53 : vector<2x256xf32>
    %55 = arith.mulf %49, %54 : vector<2x256xf32>
    %c0_26 = arith.constant 0 : index
    %c128 = arith.constant 128 : index
    %56 = vector.load %arg11[%c0_26, %c128] : memref<2x512xf32, #tpu.memory_space<vmem>>, vector<2x256xf32>
    tpu.vector_store %arg11[%c0_26, %c128], %55 {strides = array<i32>} : memref<2x512xf32, #tpu.memory_space<vmem>>, vector<2x256xf32>,
    %c0_27 = arith.constant 0 : index
    %c112 = arith.constant 112 : index
    %57 = vector.load %arg11[%c0_27, %c112] : memref<2x512xf32, #tpu.memory_space<vmem>>, vector<2x256xf32>
    %c1 = arith.constant 1 : index
    %c0_28 = arith.constant 0 : index
    %c0_29 = arith.constant 0 : index
    %58 = vector.load %arg8[%c1, %c0_28, %c0_29] : memref<9x2x2xf32, #tpu.memory_space<vmem>>, vector<1x2x2xf32>
    %59 = vector.shape_cast %58 : vector<1x2x2xf32> to vector<2x2xf32>
    %cst_30 = arith.constant dense<0.000000e+00> : vector<2x256xf32>
    %60 = tpu.matmul %59, %57, %cst_30 {dimension_numbers = #tpu.dot_dimension_numbers<[1], [0], [0], [1], [0, 0, 1, 1], [], []>} : vector<2x2xf32>, vector<2x256xf32>, vector<2x256xf32> -> vector<2x256xf32>
    %c4 = arith.constant 4 : index
    %c0_31 = arith.constant 0 : index
    %c0_32 = arith.constant 0 : index
    %61 = vector.load %arg8[%c4, %c0_31, %c0_32] : memref<9x2x2xf32, #tpu.memory_space<vmem>>, vector<1x2x2xf32>
    %62 = vector.shape_cast %61 : vector<1x2x2xf32> to vector<2x2xf32>
    %cst_33 = arith.constant dense<0.000000e+00> : vector<2x256xf32>
    %63 = tpu.matmul %62, %55, %cst_33 {dimension_numbers = #tpu.dot_dimension_numbers<[1], [0], [0], [1], [0, 0, 1, 1], [], []>} : vector<2x2xf32>, vector<2x256xf32>, vector<2x256xf32> -> vector<2x256xf32>
    %64 = arith.addf %60, %63 : vector<2x256xf32>
    %c0_34 = arith.constant 0 : index
    %c144 = arith.constant 144 : index
    %65 = vector.load %arg11[%c0_34, %c144] : memref<2x512xf32, #tpu.memory_space<vmem>>, vector<2x256xf32>
    %c7 = arith.constant 7 : index
    %c0_35 = arith.constant 0 : index
    %c0_36 = arith.constant 0 : index
    %66 = vector.load %arg8[%c7, %c0_35, %c0_36] : memref<9x2x2xf32, #tpu.memory_space<vmem>>, vector<1x2x2xf32>
    %67 = vector.shape_cast %66 : vector<1x2x2xf32> to vector<2x2xf32>
    %cst_37 = arith.constant dense<0.000000e+00> : vector<2x256xf32>
    %68 = tpu.matmul %67, %65, %cst_37 {dimension_numbers = #tpu.dot_dimension_numbers<[1], [0], [0], [1], [0, 0, 1, 1], [], []>} : vector<2x2xf32>, vector<2x256xf32>, vector<2x256xf32> -> vector<2x256xf32>
    %69 = arith.addf %64, %68 : vector<2x256xf32>
    %c0_38 = arith.constant 0 : index
    %c111 = arith.constant 111 : index
    %70 = vector.load %arg11[%c0_38, %c111] : memref<2x512xf32, #tpu.memory_space<vmem>>, vector<2x256xf32>
    %c0_39 = arith.constant 0 : index
    %c0_40 = arith.constant 0 : index
    %c0_41 = arith.constant 0 : index
    %71 = vector.load %arg8[%c0_39, %c0_40, %c0_41] : memref<9x2x2xf32, #tpu.memory_space<vmem>>, vector<1x2x2xf32>
    %72 = vector.shape_cast %71 : vector<1x2x2xf32> to vector<2x2xf32>
    %cst_42 = arith.constant dense<0.000000e+00> : vector<2x256xf32>
    %73 = tpu.matmul %72, %70, %cst_42 {dimension_numbers = #tpu.dot_dimension_numbers<[1], [0], [0], [1], [0, 0, 1, 1], [], []>} : vector<2x2xf32>, vector<2x256xf32>, vector<2x256xf32> -> vector<2x256xf32>
    %c0_43 = arith.constant 0 : index
    %c127 = arith.constant 127 : index
    %74 = vector.load %arg11[%c0_43, %c127] : memref<2x512xf32, #tpu.memory_space<vmem>>, vector<2x256xf32>
    %c3 = arith.constant 3 : index
    %c0_44 = arith.constant 0 : index
    %c0_45 = arith.constant 0 : index
    %75 = vector.load %arg8[%c3, %c0_44, %c0_45] : memref<9x2x2xf32, #tpu.memory_space<vmem>>, vector<1x2x2xf32>
    %76 = vector.shape_cast %75 : vector<1x2x2xf32> to vector<2x2xf32>
    %cst_46 = arith.constant dense<0.000000e+00> : vector<2x256xf32>
    %77 = tpu.matmul %76, %74, %cst_46 {dimension_numbers = #tpu.dot_dimension_numbers<[1], [0], [0], [1], [0, 0, 1, 1], [], []>} : vector<2x2xf32>, vector<2x256xf32>, vector<2x256xf32> -> vector<2x256xf32>
    %78 = arith.addf %73, %77 : vector<2x256xf32>
    %c0_47 = arith.constant 0 : index
    %c143 = arith.constant 143 : index
    %79 = vector.load %arg11[%c0_47, %c143] : memref<2x512xf32, #tpu.memory_space<vmem>>, vector<2x256xf32>
    %c6 = arith.constant 6 : index
    %c0_48 = arith.constant 0 : index
    %c0_49 = arith.constant 0 : index
    %80 = vector.load %arg8[%c6, %c0_48, %c0_49] : memref<9x2x2xf32, #tpu.memory_space<vmem>>, vector<1x2x2xf32>
    %81 = vector.shape_cast %80 : vector<1x2x2xf32> to vector<2x2xf32>
    %cst_50 = arith.constant dense<0.000000e+00> : vector<2x256xf32>
    %82 = tpu.matmul %81, %79, %cst_50 {dimension_numbers = #tpu.dot_dimension_numbers<[1], [0], [0], [1], [0, 0, 1, 1], [], []>} : vector<2x2xf32>, vector<2x256xf32>, vector<2x256xf32> -> vector<2x256xf32>
    %83 = arith.addf %78, %82 : vector<2x256xf32>
    %c0_51 = arith.constant 0 : index
    %c113 = arith.constant 113 : index
    %84 = vector.load %arg11[%c0_51, %c113] : memref<2x512xf32, #tpu.memory_space<vmem>>, vector<2x256xf32>
    %c2 = arith.constant 2 : index
    %c0_52 = arith.constant 0 : index
    %c0_53 = arith.constant 0 : index
    %85 = vector.load %arg8[%c2, %c0_52, %c0_53] : memref<9x2x2xf32, #tpu.memory_space<vmem>>, vector<1x2x2xf32>
    %86 = vector.shape_cast %85 : vector<1x2x2xf32> to vector<2x2xf32>
    %cst_54 = arith.constant dense<0.000000e+00> : vector<2x256xf32>
    %87 = tpu.matmul %86, %84, %cst_54 {dimension_numbers = #tpu.dot_dimension_numbers<[1], [0], [0], [1], [0, 0, 1, 1], [], []>} : vector<2x2xf32>, vector<2x256xf32>, vector<2x256xf32> -> vector<2x256xf32>
    %c0_55 = arith.constant 0 : index
    %c129 = arith.constant 129 : index
    %88 = vector.load %arg11[%c0_55, %c129] : memref<2x512xf32, #tpu.memory_space<vmem>>, vector<2x256xf32>
    %c5 = arith.constant 5 : index
    %c0_56 = arith.constant 0 : index
    %c0_57 = arith.constant 0 : index
    %89 = vector.load %arg8[%c5, %c0_56, %c0_57] : memref<9x2x2xf32, #tpu.memory_space<vmem>>, vector<1x2x2xf32>
    %90 = vector.shape_cast %89 : vector<1x2x2xf32> to vector<2x2xf32>
    %cst_58 = arith.constant dense<0.000000e+00> : vector<2x256xf32>
    %91 = tpu.matmul %90, %88, %cst_58 {dimension_numbers = #tpu.dot_dimension_numbers<[1], [0], [0], [1], [0, 0, 1, 1], [], []>} : vector<2x2xf32>, vector<2x256xf32>, vector<2x256xf32> -> vector<2x256xf32>
    %92 = arith.addf %87, %91 : vector<2x256xf32>
    %c0_59 = arith.constant 0 : index
    %c145 = arith.constant 145 : index
    %93 = vector.load %arg11[%c0_59, %c145] : memref<2x512xf32, #tpu.memory_space<vmem>>, vector<2x256xf32>
    %c8 = arith.constant 8 : index
    %c0_60 = arith.constant 0 : index
    %c0_61 = arith.constant 0 : index
    %94 = vector.load %arg8[%c8, %c0_60, %c0_61] : memref<9x2x2xf32, #tpu.memory_space<vmem>>, vector<1x2x2xf32>
    %95 = vector.shape_cast %94 : vector<1x2x2xf32> to vector<2x2xf32>
    %cst_62 = arith.constant dense<0.000000e+00> : vector<2x256xf32>
    %96 = tpu.matmul %95, %93, %cst_62 {dimension_numbers = #tpu.dot_dimension_numbers<[1], [0], [0], [1], [0, 0, 1, 1], [], []>} : vector<2x2xf32>, vector<2x256xf32>, vector<2x256xf32> -> vector<2x256xf32>
    %97 = arith.addf %92, %96 : vector<2x256xf32>
    %98 = vector.broadcast %35 : vector<1x256xf32> to vector<2x256xf32>
    %99 = arith.mulf %98, %83 : vector<2x256xf32>
    %100 = arith.addf %69, %99 : vector<2x256xf32>
    %101 = vector.broadcast %39 : vector<1x256xf32> to vector<2x256xf32>
    %102 = arith.mulf %101, %97 : vector<2x256xf32>
    %103 = arith.addf %100, %102 : vector<2x256xf32>
    %104 = vector.broadcast %46 : vector<2x1xf32> to vector<2x256xf32>
    %105 = arith.addf %103, %104 : vector<2x256xf32>
    %106 = arith.negf %105 : vector<2x256xf32>
    %107 = math.exp %106 : vector<2x256xf32>
    %cst_63 = arith.constant 1.000000e+00 : f32
    %108 = vector.broadcast %cst_63 : f32 to vector<2x256xf32>
    %109 = arith.addf %108, %107 : vector<2x256xf32>
    %110 = arith.divf %108, %109 : vector<2x256xf32>
    %111 = arith.mulf %105, %110 : vector<2x256xf32>
    %112 = arith.addf %14, %111 : vector<2x256xf32>
    %c0_64 = arith.constant 0 : index
    %c0_65 = arith.constant 0 : index
    %113 = vector.load %arg12[%c0_64, %c0_65] : memref<4x256xf32, #tpu.memory_space<vmem>>, vector<2x256xf32>
    tpu.vector_store %arg12[%c0_64, %c0_65], %112 {strides = array<i32>} : memref<4x256xf32, #tpu.memory_space<vmem>>, vector<2x256xf32>,
    %c0_66 = arith.constant 0 : index
    %c0_67 = arith.constant 0 : index
    %114 = vector.load %arg4[%c0_66, %c0_67] : memref<4x4xf32, #tpu.memory_space<vmem>>, vector<4x4xf32>
    %c0_68 = arith.constant 0 : index
    %c0_69 = arith.constant 0 : index
    %115 = vector.load %arg12[%c0_68, %c0_69] : memref<4x256xf32, #tpu.memory_space<vmem>>, vector<4x256xf32>
    %cst_70 = arith.constant dense<0.000000e+00> : vector<4x256xf32>
    %116 = tpu.matmul %114, %115, %cst_70 {dimension_numbers = #tpu.dot_dimension_numbers<[1], [0], [0], [1], [0, 0, 1, 1], [], []>} : vector<4x4xf32>, vector<4x256xf32>, vector<4x256xf32> -> vector<4x256xf32>
    %c0_71 = arith.constant 0 : index
    %c0_72 = arith.constant 0 : index
    %117 = vector.load %arg5[%c0_71, %c0_72] : memref<4x1xf32, #tpu.memory_space<vmem>>, vector<4x1xf32>
    %118 = vector.broadcast %117 : vector<4x1xf32> to vector<4x256xf32>
    %119 = arith.addf %116, %118 : vector<4x256xf32>
    %120 = arith.negf %119 : vector<4x256xf32>
    %121 = math.exp %120 : vector<4x256xf32>
    %cst_73 = arith.constant 1.000000e+00 : f32
    %122 = vector.broadcast %cst_73 : f32 to vector<4x256xf32>
    %123 = arith.addf %122, %121 : vector<4x256xf32>
    %124 = arith.divf %122, %123 : vector<4x256xf32>
    %125 = arith.mulf %119, %124 : vector<4x256xf32>
    %c0_74 = arith.constant 0 : index
    %c0_75 = arith.constant 0 : index
    %c0_76 = arith.constant 0 : index
    %126 = vector.load %arg10[%c0_74, %c0_75, %c0_76] : memref<1x4x256xf32, #tpu.memory_space<vmem>>, vector<1x4x256xf32>
    %127 = vector.shape_cast %126 : vector<1x4x256xf32> to vector<4x256xf32>
    %128 = vector.shape_cast %125 : vector<4x256xf32> to vector<1x4x256xf32>
    tpu.vector_store %arg10[%c0_74, %c0_75, %c0_76], %128 {strides = array<i32>} : memref<1x4x256xf32, #tpu.memory_space<vmem>>, vector<1x4x256xf32>,
    return
  }
  func.func @transform_0(%arg0: i32) -> (i32, i32, i32) {
    %c0_i32 = arith.constant 0 : i32
    %c0_i32_0 = arith.constant 0 : i32
    %c0_i32_1 = arith.constant 0 : i32
    return %arg0, %c0_i32, %c0_i32_0 : i32, i32, i32
  }
  func.func @transform_1(%arg0: i32) -> (i32, i32) {
    %c0_i32 = arith.constant 0 : i32
    %c0_i32_0 = arith.constant 0 : i32
    %c0_i32_1 = arith.constant 0 : i32
    return %c0_i32, %c0_i32_0 : i32, i32
  }
  func.func @transform_2(%arg0: i32) -> (i32, i32) {
    %c0_i32 = arith.constant 0 : i32
    %c0_i32_0 = arith.constant 0 : i32
    %c0_i32_1 = arith.constant 0 : i32
    return %c0_i32, %c0_i32_0 : i32, i32
  }
  func.func @transform_3(%arg0: i32) -> (i32, i32) {
    %c0_i32 = arith.constant 0 : i32
    %c0_i32_0 = arith.constant 0 : i32
    %c0_i32_1 = arith.constant 0 : i32
    return %c0_i32, %c0_i32_0 : i32, i32
  }
  func.func @transform_4(%arg0: i32) -> (i32, i32) {
    %c0_i32 = arith.constant 0 : i32
    %c0_i32_0 = arith.constant 0 : i32
    %c0_i32_1 = arith.constant 0 : i32
    return %c0_i32, %c0_i32_0 : i32, i32
  }
  func.func @transform_5(%arg0: i32) -> (i32, i32) {
    %c0_i32 = arith.constant 0 : i32
    %c0_i32_0 = arith.constant 0 : i32
    %c0_i32_1 = arith.constant 0 : i32
    return %c0_i32, %c0_i32_0 : i32, i32
  }
  func.func @transform_6(%arg0: i32) -> (i32, i32) {
    %c0_i32 = arith.constant 0 : i32
    %c0_i32_0 = arith.constant 0 : i32
    %c0_i32_1 = arith.constant 0 : i32
    return %c0_i32, %c0_i32_0 : i32, i32
  }
  func.func @transform_7(%arg0: i32) -> (i32, i32, i32) {
    %c0_i32 = arith.constant 0 : i32
    %c0_i32_0 = arith.constant 0 : i32
    %c0_i32_1 = arith.constant 0 : i32
    %c0_i32_2 = arith.constant 0 : i32
    return %c0_i32, %c0_i32_0, %c0_i32_1 : i32, i32, i32
  }
  func.func @transform_8(%arg0: i32) -> (i32, i32) {
    %c0_i32 = arith.constant 0 : i32
    %c0_i32_0 = arith.constant 0 : i32
    %c0_i32_1 = arith.constant 0 : i32
    return %c0_i32, %c0_i32_0 : i32, i32
  }
  func.func @transform_9(%arg0: i32) -> (i32, i32, i32) {
    %c0_i32 = arith.constant 0 : i32
    %c0_i32_0 = arith.constant 0 : i32
    %c0_i32_1 = arith.constant 0 : i32
    return %arg0, %c0_i32, %c0_i32_0 : i32, i32, i32
  }
}

</mosaic_0001>

<llo_original>
// kernel: tpu_custom_call.1
$region0: #{tpu_custom_call.1}
  #allocation0 [shape = 'u32[]', space=smem, size = 0x4, offset = 0x4, fixed_abs, tag = 'smem constant byte address 0x4 - core index']
  #allocation1 [shape = 'u32[144,128]{1,0:T(1,128)}', space=vmem, size = 0x12000, scoped, tag = 'internal scratch']
  #allocation2 [shape = 'f32[2,512]{1,0:T(2,128)}', space=vmem, size = 0x1000, scoped, tag = 'scratch operand']
  #allocation3 [shape = 'f32[4,256]{1,0:T(4,128)}', space=vmem, size = 0x1000, scoped, tag = 'scratch operand']
  %s0 = inlined_call_operand.vmem [shape: f32[2,4,256], index: 0, kind: input, shape index: {}]
  %s1 = inlined_call_operand.vmem [shape: f32[4,4], index: 1, kind: input, shape index: {}]
  %s2 = inlined_call_operand.vmem [shape: f32[4,1], index: 2, kind: input, shape index: {}]
  %s3 = inlined_call_operand.vmem [shape: f32[4,4], index: 3, kind: input, shape index: {}]
  %s4 = inlined_call_operand.vmem [shape: f32[4,1], index: 4, kind: input, shape index: {}]
  %s5 = inlined_call_operand.vmem [shape: f32[2,2], index: 5, kind: input, shape index: {}]
  %s6 = inlined_call_operand.vmem [shape: f32[2,1], index: 6, kind: input, shape index: {}]
  %s7 = inlined_call_operand.vmem [shape: f32[9,2,2], index: 7, kind: input, shape index: {}]
  %s8 = inlined_call_operand.vmem [shape: f32[2,1], index: 8, kind: input, shape index: {}]
  %s9 = inlined_call_operand.hbm [shape: f32[2,4,256], index: 9, kind: output, shape index: {}]
  %s10 = sld [smem:[#allocation0]]
  $region69: #{tpu_custom_call.1} parent=0
    _
  %s12 = ssub.s32 1, %s10
  %s13 = scalar_select 0, %s12, %s10
  $region1: #{tpu_custom_call.1} parent=0
    #allocation4 [shape = 'u8[8192]{0}', space=vmem, size = 0x2000, scoped, tag = 'output window, operand 0']
    #allocation5 [shape = 's32[2]{0}', space=sflag, size = 0x8, scoped, tag = 'scoped memory for tpu_custom_call.1']
    %14 = vsyncpa [#allocation5], 0
    %s15 = scalar_lea.sflag [#allocation5], 1
    %16 = vsyncpa %s15, 0
    loop: start=0, step=1, limit=4
    $region2: #{tpu_custom_call.1} parent=1 // loop_pre_header
      _
    $region3: #{tpu_custom_call.1} parent=1 // loop_header
      %s18 = sphi 0, %s22
      %p19 = scmp.ge.s32.totalorder %s18, 4
      %s28 = sphi 0, %s30
      %s31 = sphi 0, %s28
      %s32 = sphi 0, %s31
      %s48 = sphi 0, %s32
      %s52 = sphi 0, %s52
      %s54 = sphi 0, %s52
      %s55 = sphi 0, %s54
      %s69 = sphi 0, %s55
      %s73 = sphi 0, %s73
      %s75 = sphi 0, %s73
      %s76 = sphi 0, %s75
      %s90 = sphi 0, %s76
      %s94 = sphi 0, %s94
      %s96 = sphi 0, %s94
      %s97 = sphi 0, %s96
      %s111 = sphi 0, %s97
      %s115 = sphi 0, %s115
      %s117 = sphi 0, %s115
      %s118 = sphi 0, %s117
      %s132 = sphi 0, %s118
      %s136 = sphi 0, %s136
      %s138 = sphi 0, %s136
      %s139 = sphi 0, %s138
      %s153 = sphi 0, %s139
      %s157 = sphi 0, %s157
      %s159 = sphi 0, %s157
      %s160 = sphi 0, %s159
      %s174 = sphi 0, %s160
      %s178 = sphi 0, %s178
      %s180 = sphi 0, %s178
      %s181 = sphi 0, %s180
      %s195 = sphi 0, %s181
      %s199 = sphi 0, %s199
      %s201 = sphi 0, %s199
      %s202 = sphi 0, %s201
      %s216 = sphi 0, %s202
      %s222 = sphi 0, %s224
      %s225 = sphi 0, %s222
      %s226 = sphi 0, %s225
      %s242 = sphi 0, %s226
    $region4: #{tpu_custom_call.1} parent=1 // loop_header_branch
      %21 = sbr.rel (%p19) target = $region8
    $region5: #{tpu_custom_call.1} parent=1 // loop_body
      %s23 = ssub.s32 %s18, 1
      %s24 = ssub.s32 %s18, 2
      %s25 = sadd.s32 %s18, 1
      %s26 = ssub.s32 %s18, %s25
      %p27 = scmp.eq.s32.totalorder %s26, 0
      %s29 = sadd.s32 %s28, 1
      %s30 = scalar_select %p27, %s28, %s29
      %p33 = pneg %p27
      %p34 = scmp.eq.s32.totalorder %s18, 1
      %p35 = por %p33, %p34
      %p36 = scmp.ne.s32.totalorder %s28, %s31
      %p37 = scmp.eq.s32.totalorder %s18, 0
      %p38 = por %p36, %p37
      %p39 = scmp.ne.s32.totalorder %s28, %s31
      %p40 = scmp.eq.s32.totalorder %s23, 1
      %p41 = por %p39, %p40
      %p42 = scmp.ne.s32.totalorder %s31, %s32
      %p43 = scmp.eq.s32.totalorder %s23, 0
      %p44 = por %p42, %p43
      %p45 = scmp.ne.s32.totalorder %s31, %s32
      %p46 = scmp.eq.s32.totalorder %s24, 1
      %p47 = por %p45, %p46
      %p49 = scmp.ne.s32.totalorder %s32, %s48
      %p50 = scmp.eq.s32.totalorder %s24, 0
      %p51 = por %p49, %p50
      %s53 = sadd.s32 %s52, 1
      %p56 = scmp.eq.s32.totalorder %s18, 1
      %p57 = scmp.ne.s32.totalorder %s52, %s54
      %p58 = scmp.eq.s32.totalorder %s18, 0
      %p59 = por %p57, %p58
      %p60 = scmp.ne.s32.totalorder %s52, %s54
      %p61 = scmp.eq.s32.totalorder %s23, 1
      %p62 = por %p60, %p61
      %p63 = scmp.ne.s32.totalorder %s54, %s55
      %p64 = scmp.eq.s32.totalorder %s23, 0
      %p65 = por %p63, %p64
      %p66 = scmp.ne.s32.totalorder %s54, %s55
      %p67 = scmp.eq.s32.totalorder %s24, 1
      %p68 = por %p66, %p67
      %p70 = scmp.ne.s32.totalorder %s55, %s69
      %p71 = scmp.eq.s32.totalorder %s24, 0
      %p72 = por %p70, %p71
      %s74 = sadd.s32 %s73, 1
      %p77 = scmp.eq.s32.totalorder %s18, 1
      %p78 = scmp.ne.s32.totalorder %s73, %s75
      %p79 = scmp.eq.s32.totalorder %s18, 0
      %p80 = por %p78, %p79
      %p81 = scmp.ne.s32.totalorder %s73, %s75
      %p82 = scmp.eq.s32.totalorder %s23, 1
      %p83 = por %p81, %p82
      %p84 = scmp.ne.s32.totalorder %s75, %s76
      %p85 = scmp.eq.s32.totalorder %s23, 0
      %p86 = por %p84, %p85
      %p87 = scmp.ne.s32.totalorder %s75, %s76
      %p88 = scmp.eq.s32.totalorder %s24, 1
      %p89 = por %p87, %p88
      %p91 = scmp.ne.s32.totalorder %s76, %s90
      %p92 = scmp.eq.s32.totalorder %s24, 0
      %p93 = por %p91, %p92
      %s95 = sadd.s32 %s94, 1
      %p98 = scmp.eq.s32.totalorder %s18, 1
      %p99 = scmp.ne.s32.totalorder %s94, %s96
      %p100 = scmp.eq.s32.totalorder %s18, 0
      %p101 = por %p99, %p100
      %p102 = scmp.ne.s32.totalorder %s94, %s96
      %p103 = scmp.eq.s32.totalorder %s23, 1
      %p104 = por %p102, %p103
      %p105 = scmp.ne.s32.totalorder %s96, %s97
      %p106 = scmp.eq.s32.totalorder %s23, 0
      %p107 = por %p105, %p106
      %p108 = scmp.ne.s32.totalorder %s96, %s97
      %p109 = scmp.eq.s32.totalorder %s24, 1
      %p110 = por %p108, %p109
      %p112 = scmp.ne.s32.totalorder %s97, %s111
      %p113 = scmp.eq.s32.totalorder %s24, 0
      %p114 = por %p112, %p113
      %s116 = sadd.s32 %s115, 1
      %p119 = scmp.eq.s32.totalorder %s18, 1
      %p120 = scmp.ne.s32.totalorder %s115, %s117
      %p121 = scmp.eq.s32.totalorder %s18, 0
      %p122 = por %p120, %p121
      %p123 = scmp.ne.s32.totalorder %s115, %s117
      %p124 = scmp.eq.s32.totalorder %s23, 1
      %p125 = por %p123, %p124
      %p126 = scmp.ne.s32.totalorder %s117, %s118
      %p127 = scmp.eq.s32.totalorder %s23, 0
      %p128 = por %p126, %p127
      %p129 = scmp.ne.s32.totalorder %s117, %s118
      %p130 = scmp.eq.s32.totalorder %s24, 1
      %p131 = por %p129, %p130
      %p133 = scmp.ne.s32.totalorder %s118, %s132
      %p134 = scmp.eq.s32.totalorder %s24, 0
      %p135 = por %p133, %p134
      %s137 = sadd.s32 %s136, 1
      %p140 = scmp.eq.s32.totalorder %s18, 1
      %p141 = scmp.ne.s32.totalorder %s136, %s138
      %p142 = scmp.eq.s32.totalorder %s18, 0
      %p143 = por %p141, %p142
      %p144 = scmp.ne.s32.totalorder %s136, %s138
      %p145 = scmp.eq.s32.totalorder %s23, 1
      %p146 = por %p144, %p145
      %p147 = scmp.ne.s32.totalorder %s138, %s139
      %p148 = scmp.eq.s32.totalorder %s23, 0
      %p149 = por %p147, %p148
      %p150 = scmp.ne.s32.totalorder %s138, %s139
      %p151 = scmp.eq.s32.totalorder %s24, 1
      %p152 = por %p150, %p151
      %p154 = scmp.ne.s32.totalorder %s139, %s153
      %p155 = scmp.eq.s32.totalorder %s24, 0
      %p156 = por %p154, %p155
      %s158 = sadd.s32 %s157, 1
      %p161 = scmp.eq.s32.totalorder %s18, 1
      %p162 = scmp.ne.s32.totalorder %s157, %s159
      %p163 = scmp.eq.s32.totalorder %s18, 0
      %p164 = por %p162, %p163
      %p165 = scmp.ne.s32.totalorder %s157, %s159
      %p166 = scmp.eq.s32.totalorder %s23, 1
      %p167 = por %p165, %p166
      %p168 = scmp.ne.s32.totalorder %s159, %s160
      %p169 = scmp.eq.s32.totalorder %s23, 0
      %p170 = por %p168, %p169
      %p171 = scmp.ne.s32.totalorder %s159, %s160
      %p172 = scmp.eq.s32.totalorder %s24, 1
      %p173 = por %p171, %p172
      %p175 = scmp.ne.s32.totalorder %s160, %s174
      %p176 = scmp.eq.s32.totalorder %s24, 0
      %p177 = por %p175, %p176
      %s179 = sadd.s32 %s178, 1
      %p182 = scmp.eq.s32.totalorder %s18, 1
      %p183 = scmp.ne.s32.totalorder %s178, %s180
      %p184 = scmp.eq.s32.totalorder %s18, 0
      %p185 = por %p183, %p184
      %p186 = scmp.ne.s32.totalorder %s178, %s180
      %p187 = scmp.eq.s32.totalorder %s23, 1
      %p188 = por %p186, %p187
      %p189 = scmp.ne.s32.totalorder %s180, %s181
      %p190 = scmp.eq.s32.totalorder %s23, 0
      %p191 = por %p189, %p190
      %p192 = scmp.ne.s32.totalorder %s180, %s181
      %p193 = scmp.eq.s32.totalorder %s24, 1
      %p194 = por %p192, %p193
      %p196 = scmp.ne.s32.totalorder %s181, %s195
      %p197 = scmp.eq.s32.totalorder %s24, 0
      %p198 = por %p196, %p197
      %s200 = sadd.s32 %s199, 1
      %p203 = scmp.eq.s32.totalorder %s18, 1
      %p204 = scmp.ne.s32.totalorder %s199, %s201
      %p205 = scmp.eq.s32.totalorder %s18, 0
      %p206 = por %p204, %p205
      %p207 = scmp.ne.s32.totalorder %s199, %s201
      %p208 = scmp.eq.s32.totalorder %s23, 1
      %p209 = por %p207, %p208
      %p210 = scmp.ne.s32.totalorder %s201, %s202
      %p211 = scmp.eq.s32.totalorder %s23, 0
      %p212 = por %p210, %p211
      %p213 = scmp.ne.s32.totalorder %s201, %s202
      %p214 = scmp.eq.s32.totalorder %s24, 1
      %p215 = por %p213, %p214
      %p217 = scmp.ne.s32.totalorder %s202, %s216
      %p218 = scmp.eq.s32.totalorder %s24, 0
      %p219 = por %p217, %p218
      %s220 = ssub.s32 %s18, %s25
      %p221 = scmp.eq.s32.totalorder %s220, 0
      %s223 = sadd.s32 %s222, 1
      %s224 = scalar_select %p221, %s222, %s223
      %p227 = pneg %p221
      %p228 = scmp.eq.s32.totalorder %s18, 1
      %p229 = por %p227, %p228
      %p230 = scmp.ne.s32.totalorder %s222, %s225
      %p231 = scmp.eq.s32.totalorder %s18, 0
      %p232 = por %p230, %p231
      %p233 = scmp.ne.s32.totalorder %s222, %s225
      %p234 = scmp.eq.s32.totalorder %s23, 1
      %p235 = por %p233, %p234
      %p236 = scmp.ne.s32.totalorder %s225, %s226
      %p237 = scmp.eq.s32.totalorder %s23, 0
      %p238 = por %p236, %p237
      %p239 = scmp.ne.s32.totalorder %s225, %s226
      %p240 = scmp.eq.s32.totalorder %s24, 1
      %p241 = por %p239, %p240
      %p243 = scmp.ne.s32.totalorder %s226, %s242
      %p244 = scmp.eq.s32.totalorder %s24, 0
      %p245 = por %p243, %p244
      %p246 = scmp.le.s32.totalorder 1, %s18
      %p247 = scmp.lt.s32.totalorder %s18, 3
      %p248 = pnand %p246, %p247
      %p249 = pneg %p248
      // Predicated region
      $region9: #{tpu_custom_call.1} parent=5 // pred_check
        _
      $region10: #{tpu_custom_call.1} parent=5 // pred_check_branch
        %251 = sbr.rel (%p248) target = $region12
      $region11: #{tpu_custom_call.1} parent=5 // pred_region
        %s252 = ssub.s32 %s18, 1
        // Predicated region
        $region13: #{tpu_custom_call.1} parent=11 // pred_check
          %p253 = pneg %p65
        $region14: #{tpu_custom_call.1} parent=11 // pred_check_branch
          %255 = sbr.rel (%p253) target = $region16
        $region15: #{tpu_custom_call.1} parent=11 // pred_region
          _
        $region16: #{tpu_custom_call.1} parent=11 // pred_fallthru
          _
        // Predicated region
        $region17: #{tpu_custom_call.1} parent=11 // pred_check
          %p256 = pneg %p86
        $region18: #{tpu_custom_call.1} parent=11 // pred_check_branch
          %258 = sbr.rel (%p256) target = $region20
        $region19: #{tpu_custom_call.1} parent=11 // pred_region
          _
        $region20: #{tpu_custom_call.1} parent=11 // pred_fallthru
          _
        // Predicated region
        $region21: #{tpu_custom_call.1} parent=11 // pred_check
          %p259 = pneg %p107
        $region22: #{tpu_custom_call.1} parent=11 // pred_check_branch
          %261 = sbr.rel (%p259) target = $region24
        $region23: #{tpu_custom_call.1} parent=11 // pred_region
          _
        $region24: #{tpu_custom_call.1} parent=11 // pred_fallthru
          _
        // Predicated region
        $region25: #{tpu_custom_call.1} parent=11 // pred_check
          %p262 = pneg %p128
        $region26: #{tpu_custom_call.1} parent=11 // pred_check_branch
          %264 = sbr.rel (%p262) target = $region28
        $region27: #{tpu_custom_call.1} parent=11 // pred_region
          _
        $region28: #{tpu_custom_call.1} parent=11 // pred_fallthru
          _
        // Predicated region
        $region29: #{tpu_custom_call.1} parent=11 // pred_check
          %p265 = pneg %p149
        $region30: #{tpu_custom_call.1} parent=11 // pred_check_branch
          %267 = sbr.rel (%p265) target = $region32
        $region31: #{tpu_custom_call.1} parent=11 // pred_region
          _
        $region32: #{tpu_custom_call.1} parent=11 // pred_fallthru
          _
        // Predicated region
        $region33: #{tpu_custom_call.1} parent=11 // pred_check
          %p268 = pneg %p170
        $region34: #{tpu_custom_call.1} parent=11 // pred_check_branch
          %270 = sbr.rel (%p268) target = $region36
        $region35: #{tpu_custom_call.1} parent=11 // pred_region
          _
        $region36: #{tpu_custom_call.1} parent=11 // pred_fallthru
          _
        // Predicated region
        $region37: #{tpu_custom_call.1} parent=11 // pred_check
          %p271 = pneg %p191
        $region38: #{tpu_custom_call.1} parent=11 // pred_check_branch
          %273 = sbr.rel (%p271) target = $region40
        $region39: #{tpu_custom_call.1} parent=11 // pred_region
          _
        $region40: #{tpu_custom_call.1} parent=11 // pred_fallthru
          _
        // Predicated region
        $region41: #{tpu_custom_call.1} parent=11 // pred_check
          %p274 = pneg %p212
        $region42: #{tpu_custom_call.1} parent=11 // pred_check_branch
          %276 = sbr.rel (%p274) target = $region44
        $region43: #{tpu_custom_call.1} parent=11 // pred_region
          _
        $region44: #{tpu_custom_call.1} parent=11 // pred_fallthru
          _
      $region12: #{tpu_custom_call.1} parent=5 // pred_fallthru
        _
      %p277 = scmp.lt.s32.totalorder %s18, 2
      // Predicated region
      $region45: #{tpu_custom_call.1} parent=5 // pred_check
        %p278 = pneg %p277
      $region46: #{tpu_custom_call.1} parent=5 // pred_check_branch
        %280 = sbr.rel (%p278) target = $region48
      $region47: #{tpu_custom_call.1} parent=5 // pred_region
        // Predicated region
        $region49: #{tpu_custom_call.1} parent=47 // pred_check
          %p281 = pneg %p38
        $region50: #{tpu_custom_call.1} parent=47 // pred_check_branch
          %283 = sbr.rel (%p281) target = $region52
        $region51: #{tpu_custom_call.1} parent=47 // pred_region
          %p284 = scmp.lt.s32.totalorder %s18, 1
          %s285 = scalar_select %p284, %s18, 1
          %s286 = smul.addr %s285, 2
          %s287 = smul.addr %s286, 4
          %s288 = scalar_lea.vmem %s0, %s287
        $region52: #{tpu_custom_call.1} parent=47 // pred_fallthru
          _
      $region48: #{tpu_custom_call.1} parent=5 // pred_fallthru
        _
      %p289 = scmp.le.s32.totalorder 1, %s18
      %p290 = scmp.lt.s32.totalorder %s18, 3
      %p291 = pnand %p289, %p290
      %p292 = pneg %p291
      // Predicated region
      $region53: #{tpu_custom_call.1} parent=5 // pred_check
        _
      $region54: #{tpu_custom_call.1} parent=5 // pred_check_branch
        %294 = sbr.rel (%p291) target = $region56
      $region55: #{tpu_custom_call.1} parent=5 // pred_region
        %s295 = ssub.s32 %s18, 1
        %p296 = scmp.lt.s32.totalorder %s23, 1
        %s297 = scalar_select %p296, %s23, 1
        %s298 = smul.addr %s297, 2
        %s299 = smul.addr %s298, 4
        %s300 = scalar_lea.vmem %s0, %s299
        %p301 = pneg %p44
        %p302 = pneg %p41
        %p303 = pneg %p65
        %p304 = pneg %p62
        %p305 = pneg %p86
        %p306 = pneg %p83
        %p307 = pneg %p107
        %p308 = pneg %p104
        %p309 = pneg %p128
        %p310 = pneg %p125
        %p311 = pneg %p149
        %p312 = pneg %p146
        %p313 = pneg %p170
        %p314 = pneg %p167
        %p315 = pneg %p191
        %p316 = pneg %p188
        %p317 = pneg %p212
        %p318 = pneg %p209
        %p319 = pneg %p238
        %p320 = pneg %p235
        %s321 = sand.u32 %s225, 1
        %s322 = scalar_lea.sflag [#allocation5], %s321
        %s323 = sand.u32 %s225, 1
        %s324 = smul.addr %s323, 8
        %s325 = scalar_lea.vmem [#allocation4], %s324
        %p326 = scmp.lt.s32.totalorder %s23, 1
        %s327 = scalar_select %p326, %s23, 1
        %s328 = smul.addr %s327, 2
        %s329 = smul.addr %s328, 4
        %s330 = scalar_lea.vmem %s0, %s329
        %v331 = vld [vmem:[%s330] sm:$0xff]
        %v332 = vld [vmem:[%s1] sm:$0xf]
        %v333 = vld [vmem:[%s2] sm:$0xf]
        %335 = vset.pattern.permute.xlu0 0
        %336 = vperm.xlu0 %335, %v333
        %v337 = vpop.permute.xlu0 %336
        %v340 = vcombine.high %v331, %v331
        %vm341 = vcmask 31744
        %v343 = vsel %vm341, %v332, 0
        %vm345 = vcmask 1043456
        %v346 = vsel %vm345, %v331, 0
        %v348 = vsel %vm345, %v340, 0
        %350 = vmatprep.subr.mxu0 %v348
        %351 = vmatpush1.msra.mxu0 %v346
        %352 = vmatprep.subr.mxu0 0.0
        %353 = vmatpush1.msra.mxu0 0.0
        %354 = vmatprep.subr.mxu0 0.0
        %355 = vmatpush1.msra.mxu0 0.0
        %356 = vmatprep.subr.mxu0 0.0
        %357 = vmatpush1.msra.mxu0 0.0
        %358 = vmatprep.subr.mxu0 0.0
        %359 = vmatpush1.msra.mxu0 0.0
        %360 = vmatprep.subr.mxu0 0.0
        %361 = vmatpush1.msra.mxu0 0.0
        %362 = vmatprep.subr.mxu0 0.0
        %363 = vmatpush1.msra.mxu0 0.0
        %364 = vmatprep.subr.mxu0 0.0
        %365 = vmatpush1.msra.mxu0 0.0
        %366 = vmatprep.subr.mxu0 0.0
        %367 = vmatpush1.msra.mxu0 0.0
        %368 = vmatprep.subr.mxu0 0.0
        %369 = vmatpush1.msra.mxu0 0.0
        %370 = vmatprep.subr.mxu0 0.0
        %371 = vmatpush1.msra.mxu0 0.0
        %372 = vmatprep.subr.mxu0 0.0
        %373 = vmatpush1.msra.mxu0 0.0
        %374 = vmatprep.subr.mxu0 0.0
        %375 = vmatpush1.msra.mxu0 0.0
        %376 = vmatprep.subr.mxu0 0.0
        %377 = vmatpush1.msra.mxu0 0.0
        %378 = vmatprep.subr.mxu0 0.0
        %379 = vmatpush1.msra.mxu0 0.0
        %380 = vmatprep.subr.mxu0 0.0
        %381 = vmatpush1.msra.mxu0 0.0
        %382 = vmatprep.subr.mxu0 0.0
        %383 = vmatpush1.msra.mxu0 0.0
        %384 = vmatprep.subr.mxu0 0.0
        %385 = vmatpush1.msra.mxu0 0.0
        %386 = vmatprep.subr.mxu0 0.0
        %387 = vmatpush1.msra.mxu0 0.0
        %388 = vmatprep.subr.mxu0 0.0
        %389 = vmatpush1.msra.mxu0 0.0
        %390 = vmatprep.subr.mxu0 0.0
        %391 = vmatpush1.msra.mxu0 0.0
        %392 = vmatprep.subr.mxu0 0.0
        %393 = vmatpush1.msra.mxu0 0.0
        %394 = vmatprep.subr.mxu0 0.0
        %395 = vmatpush1.msra.mxu0 0.0
        %396 = vmatprep.subr.mxu0 0.0
        %397 = vmatpush1.msra.mxu0 0.0
        %398 = vmatprep.subr.mxu0 0.0
        %399 = vmatpush1.msra.mxu0 0.0
        %400 = vmatprep.subr.mxu0 0.0
        %401 = vmatpush1.msra.mxu0 0.0
        %402 = vmatprep.subr.mxu0 0.0
        %403 = vmatpush1.msra.mxu0 0.0
        %404 = vmatprep.subr.mxu0 0.0
        %405 = vmatpush1.msra.mxu0 0.0
        %406 = vmatprep.subr.mxu0 0.0
        %407 = vmatpush1.msra.mxu0 0.0
        %408 = vmatprep.subr.mxu0 0.0
        %409 = vmatpush1.msra.mxu0 0.0
        %410 = vmatprep.subr.mxu0 0.0
        %411 = vmatpush1.msra.mxu0 0.0
        %412 = vmatprep.subr.mxu0 0.0
        %413 = vmatpush1.msra.mxu0 0.0
        %414 = vmatprep.mubr.f32.mxu0 0.0
        %415 = vmatmul.mubr.f32.gmra.mrb[0].mxu0 %v343
        %v416 = vpop.f32.mrb[0].mxu0
        %v417 = vadd.f32 %v337, %v416
        %v418 = vpop.f32.mrb[0].mxu0
        %v419 = vadd.f32 %v337, %v418
        %420 = vdwg.mxu0
        %v421 = vxor.u32 %v417, 2147483648
        %v422 = vxor.u32 %v419, 2147483648
        %v423 = vmul.f32 %v421, 1.442695
        %v424 = vpow.pop %v423
        %v425 = vmul.f32 %v422, 1.442695
        %v426 = vpow.pop %v425
        %v427 = vadd.f32 %v424, 1.0
        %v428 = vadd.f32 %v426, 1.0
        %v429 = vrcp.pop %v427
        %v430 = vmul.f32 1.0, %v429
        %v431 = vrcp.pop %v428
        %v432 = vmul.f32 1.0, %v431
        %v433 = vmul.f32 %v417, %v430
        %v434 = vmul.f32 %v419, %v432
        %v437 = vcombine.low %v433, %v434
        %439 = vst [vmem:[#allocation3] sm:$0xff] %v437
        %v440 = vlaneseq
        %v441 = vand.u32 %v440, 127
        %v442 = vadd.s32 %v441, 128
        %vm443 = vcmp.lt.s32.totalorder %v441, 0
        %v444 = vsub.s32 0, %v441
        %v445 = vsel %vm443, %v444, %v441
        %v446 = vshrl.u32 %v445, 4
        %v447 = vand.u32 %v445, 15
        %v448 = vsub.s32 0, %v447
        %v449 = vsel %vm443, %v448, %v447
        %vm450 = vcmp.lt.s32.totalorder %v442, 0
        %v451 = vsub.s32 0, %v442
        %v452 = vsel %vm450, %v451, %v442
        %v453 = vshrl.u32 %v452, 4
        %v454 = vand.u32 %v452, 15
        %v455 = vsub.s32 0, %v454
        %v456 = vsel %vm450, %v455, %v454
        %vm457 = vcmp.ne.s32.totalorder %v449, 0
        %vm458 = vcmp.ne.s32.totalorder %v456, 0
        %vm459 = vcmp.lt.s32.totalorder %v449, 0
        %vm460 = vcmp.lt.s32.totalorder %v456, 0
        %vm461 = vmand %vm459, %vm457
        %vm462 = vmand %vm460, %vm458
        %v463 = vadd.s32 %v449, 16
        %v464 = vadd.s32 %v456, 16
        %v465 = vsel %vm461, %v463, %v449
        %v466 = vsel %vm462, %v464, %v456
        %vm467 = vcmp.ne.s32.totalorder %v465, 0
        %vm468 = vcmp.ne.s32.totalorder %v466, 0
        %v469 = vsel %vm467, 1, 0
        %v470 = vsel %vm468, 1, 0
        %v471 = vcvt.s32.f32 %v469
        %v472 = vcvt.s32.f32 %v470
        %vm473 = vcmp.ne.s32.totalorder %v465, 15
        %vm474 = vcmp.ne.s32.totalorder %v466, 15
        %v475 = vsel %vm473, 1, 0
        %v476 = vsel %vm474, 1, 0
        %v477 = vcvt.s32.f32 %v475
        %v478 = vcvt.s32.f32 %v476
        %479 = vst [vmem:[#allocation2] sm:$0x3] 0.0
        %480 = vst [vmem:[#allocation2 + $0x6] sm:$0x3] 0.0
        %v481 = vld [vmem:[%s5] sm:$0x3]
        %v482 = vld [vmem:[%s6] sm:$0x3]
        %v483 = vld [vmem:[%s8] sm:$0x3]
        %485 = vset.pattern.permute.xlu0 0
        %486 = vperm.xlu0 %485, %v482
        %v487 = vpop.permute.xlu0 %486
        %vm489 = vcmask 15360
        %v491 = vsel %vm489, %v481, 0
        %vm493 = vcmask 1041408
        %v494 = vsel %vm493, %v433, 0
        %v496 = vsel %vm493, %v434, 0
        %498 = vmatprep.subr.mxu0 %v496
        %499 = vmatpush1.msra.mxu0 %v494
        %500 = vmatprep.subr.mxu0 0.0
        %501 = vmatpush1.msra.mxu0 0.0
        %502 = vmatprep.subr.mxu0 0.0
        %503 = vmatpush1.msra.mxu0 0.0
        %504 = vmatprep.subr.mxu0 0.0
        %505 = vmatpush1.msra.mxu0 0.0
        %506 = vmatprep.subr.mxu0 0.0
        %507 = vmatpush1.msra.mxu0 0.0
        %508 = vmatprep.subr.mxu0 0.0
        %509 = vmatpush1.msra.mxu0 0.0
        %510 = vmatprep.subr.mxu0 0.0
        %511 = vmatpush1.msra.mxu0 0.0
        %512 = vmatprep.subr.mxu0 0.0
        %513 = vmatpush1.msra.mxu0 0.0
        %514 = vmatprep.subr.mxu0 0.0
        %515 = vmatpush1.msra.mxu0 0.0
        %516 = vmatprep.subr.mxu0 0.0
        %517 = vmatpush1.msra.mxu0 0.0
        %518 = vmatprep.subr.mxu0 0.0
        %519 = vmatpush1.msra.mxu0 0.0
        %520 = vmatprep.subr.mxu0 0.0
        %521 = vmatpush1.msra.mxu0 0.0
        %522 = vmatprep.subr.mxu0 0.0
        %523 = vmatpush1.msra.mxu0 0.0
        %524 = vmatprep.subr.mxu0 0.0
        %525 = vmatpush1.msra.mxu0 0.0
        %526 = vmatprep.subr.mxu0 0.0
        %527 = vmatpush1.msra.mxu0 0.0
        %528 = vmatprep.subr.mxu0 0.0
        %529 = vmatpush1.msra.mxu0 0.0
        %530 = vmatprep.subr.mxu0 0.0
        %531 = vmatpush1.msra.mxu0 0.0
        %532 = vmatprep.subr.mxu0 0.0
        %533 = vmatpush1.msra.mxu0 0.0
        %534 = vmatprep.subr.mxu0 0.0
        %535 = vmatpush1.msra.mxu0 0.0
        %536 = vmatprep.subr.mxu0 0.0
        %537 = vmatpush1.msra.mxu0 0.0
        %538 = vmatprep.subr.mxu0 0.0
        %539 = vmatpush1.msra.mxu0 0.0
        %540 = vmatprep.subr.mxu0 0.0
        %541 = vmatpush1.msra.mxu0 0.0
        %542 = vmatprep.subr.mxu0 0.0
        %543 = vmatpush1.msra.mxu0 0.0
        %544 = vmatprep.subr.mxu0 0.0
        %545 = vmatpush1.msra.mxu0 0.0
        %546 = vmatprep.subr.mxu0 0.0
        %547 = vmatpush1.msra.mxu0 0.0
        %548 = vmatprep.subr.mxu0 0.0
        %549 = vmatpush1.msra.mxu0 0.0
        %550 = vmatprep.subr.mxu0 0.0
        %551 = vmatpush1.msra.mxu0 0.0
        %552 = vmatprep.subr.mxu0 0.0
        %553 = vmatpush1.msra.mxu0 0.0
        %554 = vmatprep.subr.mxu0 0.0
        %555 = vmatpush1.msra.mxu0 0.0
        %556 = vmatprep.subr.mxu0 0.0
        %557 = vmatpush1.msra.mxu0 0.0
        %558 = vmatprep.subr.mxu0 0.0
        %559 = vmatpush1.msra.mxu0 0.0
        %560 = vmatprep.subr.mxu0 0.0
        %561 = vmatpush1.msra.mxu0 0.0
        %562 = vmatprep.mubr.f32.mxu0 0.0
        %563 = vmatmul.mubr.f32.gmra.mrb[0].mxu0 %v491
        %v564 = vpop.f32.mrb[0].mxu0
        %v565 = vadd.f32 %v487, %v564
        %v566 = vpop.f32.mrb[0].mxu0
        %v567 = vadd.f32 %v487, %v566
        %568 = vdwg.mxu0
        %v569 = vxor.u32 %v565, 2147483648
        %v570 = vxor.u32 %v567, 2147483648
        %v571 = vmul.f32 %v569, 1.442695
        %v572 = vpow.pop %v571
        %v573 = vmul.f32 %v570, 1.442695
        %v574 = vpow.pop %v573
        %v575 = vadd.f32 %v572, 1.0
        %v576 = vadd.f32 %v574, 1.0
        %v577 = vrcp.pop %v575
        %v578 = vmul.f32 1.0, %v577
        %v579 = vrcp.pop %v576
        %v580 = vmul.f32 1.0, %v579
        %v581 = vmul.f32 %v565, %v578
        %v582 = vmul.f32 %v567, %v580
        %v585 = vcombine.low %v581, %v582
        %v587 = vunpack.c.l.s4 1983009808
        %v588 = vunpack.c.0.s8 %v587
        %v589 = vlaneseq
        %v590 = vshrl.u32 %v589, 7
        %v591 = vsub.s32 %v588, %v590
        %v592 = vrot.slane %v585, %v591
        %594 = vst [vmem:[#allocation2 + $0x2] sm:$0xf] %v592
        %v595 = vld [vmem:[#allocation2] sm:$0x3f]
        %s596 = scalar_lea.vmem %s7, 2
        %v597 = vld [vmem:[%s596] sm:$0x3]
        %s598 = scalar_lea.vmem %s7, 8
        %v599 = vld [vmem:[%s598] sm:$0x3]
        %v601 = vsel %vm489, %v599, 0
        %v603 = vsel %vm493, %v581, 0
        %v605 = vsel %vm493, %v582, 0
        %607 = vmatprep.subr.mxu0 %v605
        %608 = vmatpush1.msra.mxu0 %v603
        %609 = vmatprep.subr.mxu0 0.0
        %610 = vmatpush1.msra.mxu0 0.0
        %611 = vmatprep.subr.mxu0 0.0
        %612 = vmatpush1.msra.mxu0 0.0
        %613 = vmatprep.subr.mxu0 0.0
        %614 = vmatpush1.msra.mxu0 0.0
        %615 = vmatprep.subr.mxu0 0.0
        %616 = vmatpush1.msra.mxu0 0.0
        %617 = vmatprep.subr.mxu0 0.0
        %618 = vmatpush1.msra.mxu0 0.0
        %619 = vmatprep.subr.mxu0 0.0
        %620 = vmatpush1.msra.mxu0 0.0
        %621 = vmatprep.subr.mxu0 0.0
        %622 = vmatpush1.msra.mxu0 0.0
        %623 = vmatprep.subr.mxu0 0.0
        %624 = vmatpush1.msra.mxu0 0.0
        %625 = vmatprep.subr.mxu0 0.0
        %626 = vmatpush1.msra.mxu0 0.0
        %627 = vmatprep.subr.mxu0 0.0
        %628 = vmatpush1.msra.mxu0 0.0
        %629 = vmatprep.subr.mxu0 0.0
        %630 = vmatpush1.msra.mxu0 0.0
        %631 = vmatprep.subr.mxu0 0.0
        %632 = vmatpush1.msra.mxu0 0.0
        %633 = vmatprep.subr.mxu0 0.0
        %634 = vmatpush1.msra.mxu0 0.0
        %635 = vmatprep.subr.mxu0 0.0
        %636 = vmatpush1.msra.mxu0 0.0
        %637 = vmatprep.subr.mxu0 0.0
        %638 = vmatpush1.msra.mxu0 0.0
        %639 = vmatprep.subr.mxu0 0.0
        %640 = vmatpush1.msra.mxu0 0.0
        %641 = vmatprep.subr.mxu0 0.0
        %642 = vmatpush1.msra.mxu0 0.0
        %643 = vmatprep.subr.mxu0 0.0
        %644 = vmatpush1.msra.mxu0 0.0
        %645 = vmatprep.subr.mxu0 0.0
        %646 = vmatpush1.msra.mxu0 0.0
        %647 = vmatprep.subr.mxu0 0.0
        %648 = vmatpush1.msra.mxu0 0.0
        %649 = vmatprep.subr.mxu0 0.0
        %650 = vmatpush1.msra.mxu0 0.0
        %651 = vmatprep.subr.mxu0 0.0
        %652 = vmatpush1.msra.mxu0 0.0
        %653 = vmatprep.subr.mxu0 0.0
        %654 = vmatpush1.msra.mxu0 0.0
        %655 = vmatprep.subr.mxu0 0.0
        %656 = vmatpush1.msra.mxu0 0.0
        %657 = vmatprep.subr.mxu0 0.0
        %658 = vmatpush1.msra.mxu0 0.0
        %659 = vmatprep.subr.mxu0 0.0
        %660 = vmatpush1.msra.mxu0 0.0
        %661 = vmatprep.subr.mxu0 0.0
        %662 = vmatpush1.msra.mxu0 0.0
        %663 = vmatprep.subr.mxu0 0.0
        %664 = vmatpush1.msra.mxu0 0.0
        %665 = vmatprep.subr.mxu0 0.0
        %666 = vmatpush1.msra.mxu0 0.0
        %667 = vmatprep.subr.mxu0 0.0
        %668 = vmatpush1.msra.mxu0 0.0
        %669 = vmatprep.subr.mxu0 0.0
        %670 = vmatpush1.msra.mxu0 0.0
        %671 = vmatprep.mubr.f32.mxu0 0.0
        %672 = vmatmul.mubr.f32.gmra.mrb[0].mxu0 %v601
        %v673 = vpop.f32.mrb[0].mxu0
        %v674 = vadd.f32 0.0, %v673
        %v675 = vpop.f32.mrb[0].mxu0
        %v676 = vadd.f32 0.0, %v675
        %677 = vdwg.mxu0
        %v679 = vcombine.high %v595, %v595
        %v681 = vunpack.c.l.s4 1983009808
        %v682 = vunpack.c.0.s8 %v681
        %v683 = vlaneseq
        %v684 = vshrl.u32 %v683, 7
        %v685 = vsub.s32 %v682, %v684
        %v686 = vrot.slane %v595, %v685
        %v688 = vunpack.c.l.s4 1983009808
        %v689 = vunpack.c.0.s8 %v688
        %v690 = vlaneseq
        %v691 = vshrl.u32 %v690, 7
        %v692 = vsub.s32 %v689, %v691
        %v693 = vrot.slane %v679, %v692
        %v694 = vcombine.high %v686, %v686
        %695 = vrot.lane.b32.xlu0 %v686, 16
        %v696 = vpop.permute.xlu0 %695
        %697 = vrot.lane.b32.xlu0 %v694, 16
        %v698 = vpop.permute.xlu0 %697
        %699 = vrot.lane.b32.xlu0 %v693, 16
        %v700 = vpop.permute.xlu0 %699
        %vm701 = vcmask 130048
        %v702 = vsel %vm701, %v696, %v698
        %v703 = vsel %vm701, %v698, %v700
        %v705 = vsel %vm489, %v597, 0
        %v707 = vsel %vm493, %v702, 0
        %v709 = vsel %vm493, %v703, 0
        %711 = vmatprep.subr.mxu0 %v709
        %712 = vmatpush1.msra.mxu0 %v707
        %713 = vmatprep.subr.mxu0 0.0
        %714 = vmatpush1.msra.mxu0 0.0
        %715 = vmatprep.subr.mxu0 0.0
        %716 = vmatpush1.msra.mxu0 0.0
        %717 = vmatprep.subr.mxu0 0.0
        %718 = vmatpush1.msra.mxu0 0.0
        %719 = vmatprep.subr.mxu0 0.0
        %720 = vmatpush1.msra.mxu0 0.0
        %721 = vmatprep.subr.mxu0 0.0
        %722 = vmatpush1.msra.mxu0 0.0
        %723 = vmatprep.subr.mxu0 0.0
        %724 = vmatpush1.msra.mxu0 0.0
        %725 = vmatprep.subr.mxu0 0.0
        %726 = vmatpush1.msra.mxu0 0.0
        %727 = vmatprep.subr.mxu0 0.0
        %728 = vmatpush1.msra.mxu0 0.0
        %729 = vmatprep.subr.mxu0 0.0
        %730 = vmatpush1.msra.mxu0 0.0
        %731 = vmatprep.subr.mxu0 0.0
        %732 = vmatpush1.msra.mxu0 0.0
        %733 = vmatprep.subr.mxu0 0.0
        %734 = vmatpush1.msra.mxu0 0.0
        %735 = vmatprep.subr.mxu0 0.0
        %736 = vmatpush1.msra.mxu0 0.0
        %737 = vmatprep.subr.mxu0 0.0
        %738 = vmatpush1.msra.mxu0 0.0
        %739 = vmatprep.subr.mxu0 0.0
        %740 = vmatpush1.msra.mxu0 0.0
        %741 = vmatprep.subr.mxu0 0.0
        %742 = vmatpush1.msra.mxu0 0.0
        %743 = vmatprep.subr.mxu0 0.0
        %744 = vmatpush1.msra.mxu0 0.0
        %745 = vmatprep.subr.mxu0 0.0
        %746 = vmatpush1.msra.mxu0 0.0
        %747 = vmatprep.subr.mxu0 0.0
        %748 = vmatpush1.msra.mxu0 0.0
        %749 = vmatprep.subr.mxu0 0.0
        %750 = vmatpush1.msra.mxu0 0.0
        %751 = vmatprep.subr.mxu0 0.0
        %752 = vmatpush1.msra.mxu0 0.0
        %753 = vmatprep.subr.mxu0 0.0
        %754 = vmatpush1.msra.mxu0 0.0
        %755 = vmatprep.subr.mxu0 0.0
        %756 = vmatpush1.msra.mxu0 0.0
        %757 = vmatprep.subr.mxu0 0.0
        %758 = vmatpush1.msra.mxu0 0.0
        %759 = vmatprep.subr.mxu0 0.0
        %760 = vmatpush1.msra.mxu0 0.0
        %761 = vmatprep.subr.mxu0 0.0
        %762 = vmatpush1.msra.mxu0 0.0
        %763 = vmatprep.subr.mxu0 0.0
        %764 = vmatpush1.msra.mxu0 0.0
        %765 = vmatprep.subr.mxu0 0.0
        %766 = vmatpush1.msra.mxu0 0.0
        %767 = vmatprep.subr.mxu0 0.0
        %768 = vmatpush1.msra.mxu0 0.0
        %769 = vmatprep.subr.mxu0 0.0
        %770 = vmatpush1.msra.mxu0 0.0
        %771 = vmatprep.subr.mxu0 0.0
        %772 = vmatpush1.msra.mxu0 0.0
        %773 = vmatprep.subr.mxu0 0.0
        %774 = vmatpush1.msra.mxu0 0.0
        %775 = vmatprep.mubr.f32.mxu0 0.0
        %776 = vmatmul.mubr.f32.gmra.mrb[0].mxu0 %v705
        %v777 = vpop.f32.mrb[0].mxu0
        %v778 = vadd.f32 %v674, %v777
        %v779 = vpop.f32.mrb[0].mxu0
        %v780 = vadd.f32 %v676, %v779
        %781 = vdwg.mxu0
        %v782 = vld [vmem:[#allocation2 + $0x2] sm:$0x3f]
        %s783 = scalar_lea.vmem %s7, 14
        %v784 = vld [vmem:[%s783] sm:$0x3]
        %v786 = vcombine.high %v782, %v782
        %v788 = vunpack.c.l.s4 1983009808
        %v789 = vunpack.c.0.s8 %v788
        %v790 = vlaneseq
        %v791 = vshrl.u32 %v790, 7
        %v792 = vsub.s32 %v789, %v791
        %v793 = vrot.slane %v782, %v792
        %v795 = vunpack.c.l.s4 1983009808
        %v796 = vunpack.c.0.s8 %v795
        %v797 = vlaneseq
        %v798 = vshrl.u32 %v797, 7
        %v799 = vsub.s32 %v796, %v798
        %v800 = vrot.slane %v786, %v799
        %v801 = vcombine.high %v793, %v793
        %802 = vrot.lane.b32.xlu0 %v793, 112
        %v803 = vpop.permute.xlu0 %802
        %804 = vrot.lane.b32.xlu0 %v801, 112
        %v805 = vpop.permute.xlu0 %804
        %806 = vrot.lane.b32.xlu0 %v800, 112
        %v807 = vpop.permute.xlu0 %806
        %vm808 = vcmask 916480
        %v809 = vsel %vm808, %v803, %v805
        %v810 = vsel %vm808, %v805, %v807
        %v812 = vsel %vm489, %v784, 0
        %v814 = vsel %vm493, %v809, 0
        %v816 = vsel %vm493, %v810, 0
        %818 = vmatprep.subr.mxu0 %v816
        %819 = vmatpush1.msra.mxu0 %v814
        %820 = vmatprep.subr.mxu0 0.0
        %821 = vmatpush1.msra.mxu0 0.0
        %822 = vmatprep.subr.mxu0 0.0
        %823 = vmatpush1.msra.mxu0 0.0
        %824 = vmatprep.subr.mxu0 0.0
        %825 = vmatpush1.msra.mxu0 0.0
        %826 = vmatprep.subr.mxu0 0.0
        %827 = vmatpush1.msra.mxu0 0.0
        %828 = vmatprep.subr.mxu0 0.0
        %829 = vmatpush1.msra.mxu0 0.0
        %830 = vmatprep.subr.mxu0 0.0
        %831 = vmatpush1.msra.mxu0 0.0
        %832 = vmatprep.subr.mxu0 0.0
        %833 = vmatpush1.msra.mxu0 0.0
        %834 = vmatprep.subr.mxu0 0.0
        %835 = vmatpush1.msra.mxu0 0.0
        %836 = vmatprep.subr.mxu0 0.0
        %837 = vmatpush1.msra.mxu0 0.0
        %838 = vmatprep.subr.mxu0 0.0
        %839 = vmatpush1.msra.mxu0 0.0
        %840 = vmatprep.subr.mxu0 0.0
        %841 = vmatpush1.msra.mxu0 0.0
        %842 = vmatprep.subr.mxu0 0.0
        %843 = vmatpush1.msra.mxu0 0.0
        %844 = vmatprep.subr.mxu0 0.0
        %845 = vmatpush1.msra.mxu0 0.0
        %846 = vmatprep.subr.mxu0 0.0
        %847 = vmatpush1.msra.mxu0 0.0
        %848 = vmatprep.subr.mxu0 0.0
        %849 = vmatpush1.msra.mxu0 0.0
        %850 = vmatprep.subr.mxu0 0.0
        %851 = vmatpush1.msra.mxu0 0.0
        %852 = vmatprep.subr.mxu0 0.0
        %853 = vmatpush1.msra.mxu0 0.0
        %854 = vmatprep.subr.mxu0 0.0
        %855 = vmatpush1.msra.mxu0 0.0
        %856 = vmatprep.subr.mxu0 0.0
        %857 = vmatpush1.msra.mxu0 0.0
        %858 = vmatprep.subr.mxu0 0.0
        %859 = vmatpush1.msra.mxu0 0.0
        %860 = vmatprep.subr.mxu0 0.0
        %861 = vmatpush1.msra.mxu0 0.0
        %862 = vmatprep.subr.mxu0 0.0
        %863 = vmatpush1.msra.mxu0 0.0
        %864 = vmatprep.subr.mxu0 0.0
        %865 = vmatpush1.msra.mxu0 0.0
        %866 = vmatprep.subr.mxu0 0.0
        %867 = vmatpush1.msra.mxu0 0.0
        %868 = vmatprep.subr.mxu0 0.0
        %869 = vmatpush1.msra.mxu0 0.0
        %870 = vmatprep.subr.mxu0 0.0
        %871 = vmatpush1.msra.mxu0 0.0
        %872 = vmatprep.subr.mxu0 0.0
        %873 = vmatpush1.msra.mxu0 0.0
        %874 = vmatprep.subr.mxu0 0.0
        %875 = vmatpush1.msra.mxu0 0.0
        %876 = vmatprep.subr.mxu0 0.0
        %877 = vmatpush1.msra.mxu0 0.0
        %878 = vmatprep.subr.mxu0 0.0
        %879 = vmatpush1.msra.mxu0 0.0
        %880 = vmatprep.subr.mxu0 0.0
        %881 = vmatpush1.msra.mxu0 0.0
        %882 = vmatprep.mubr.f32.mxu0 0.0
        %883 = vmatmul.mubr.f32.gmra.mrb[0].mxu0 %v812
        %v884 = vpop.f32.mrb[0].mxu0
        %v885 = vadd.f32 0.0, %v884
        %v886 = vpop.f32.mrb[0].mxu0
        %v887 = vadd.f32 0.0, %v886
        %888 = vdwg.mxu0
        %v889 = vadd.f32 %v778, %v885
        %v890 = vadd.f32 %v780, %v887
        %v891 = vld [vmem:[#allocation2] sm:$0x3f]
        %v892 = vld [vmem:[%s7] sm:$0x3]
        %s893 = scalar_lea.vmem %s7, 6
        %v894 = vld [vmem:[%s893] sm:$0x3]
        %v896 = vcombine.high %v891, %v891
        %v898 = vunpack.c.l.s4 1983009808
        %v899 = vunpack.c.0.s8 %v898
        %v900 = vlaneseq
        %v901 = vshrl.u32 %v900, 7
        %v902 = vsub.s32 %v899, %v901
        %v903 = vrot.slane %v891, %v902
        %v905 = vunpack.c.l.s4 1983009808
        %v906 = vunpack.c.0.s8 %v905
        %v907 = vlaneseq
        %v908 = vshrl.u32 %v907, 7
        %v909 = vsub.s32 %v906, %v908
        %v910 = vrot.slane %v896, %v909
        %v911 = vcombine.high %v903, %v903
        %912 = vrot.lane.b32.xlu0 %v903, 1
        %v913 = vpop.permute.xlu0 %912
        %914 = vrot.lane.b32.xlu0 %v911, 1
        %v915 = vpop.permute.xlu0 %914
        %916 = vrot.lane.b32.xlu0 %v910, 1
        %v917 = vpop.permute.xlu0 %916
        %vm918 = vcmask 7168
        %v919 = vsel %vm918, %v913, %v915
        %v920 = vsel %vm918, %v915, %v917
        %v922 = vsel %vm489, %v894, 0
        %v924 = vsel %vm493, %v919, 0
        %v926 = vsel %vm493, %v920, 0
        %928 = vmatprep.subr.mxu0 %v926
        %929 = vmatpush1.msra.mxu0 %v924
        %930 = vmatprep.subr.mxu0 0.0
        %931 = vmatpush1.msra.mxu0 0.0
        %932 = vmatprep.subr.mxu0 0.0
        %933 = vmatpush1.msra.mxu0 0.0
        %934 = vmatprep.subr.mxu0 0.0
        %935 = vmatpush1.msra.mxu0 0.0
        %936 = vmatprep.subr.mxu0 0.0
        %937 = vmatpush1.msra.mxu0 0.0
        %938 = vmatprep.subr.mxu0 0.0
        %939 = vmatpush1.msra.mxu0 0.0
        %940 = vmatprep.subr.mxu0 0.0
        %941 = vmatpush1.msra.mxu0 0.0
        %942 = vmatprep.subr.mxu0 0.0
        %943 = vmatpush1.msra.mxu0 0.0
        %944 = vmatprep.subr.mxu0 0.0
        %945 = vmatpush1.msra.mxu0 0.0
        %946 = vmatprep.subr.mxu0 0.0
        %947 = vmatpush1.msra.mxu0 0.0
        %948 = vmatprep.subr.mxu0 0.0
        %949 = vmatpush1.msra.mxu0 0.0
        %950 = vmatprep.subr.mxu0 0.0
        %951 = vmatpush1.msra.mxu0 0.0
        %952 = vmatprep.subr.mxu0 0.0
        %953 = vmatpush1.msra.mxu0 0.0
        %954 = vmatprep.subr.mxu0 0.0
        %955 = vmatpush1.msra.mxu0 0.0
        %956 = vmatprep.subr.mxu0 0.0
        %957 = vmatpush1.msra.mxu0 0.0
        %958 = vmatprep.subr.mxu0 0.0
        %959 = vmatpush1.msra.mxu0 0.0
        %960 = vmatprep.subr.mxu0 0.0
        %961 = vmatpush1.msra.mxu0 0.0
        %962 = vmatprep.subr.mxu0 0.0
        %963 = vmatpush1.msra.mxu0 0.0
        %964 = vmatprep.subr.mxu0 0.0
        %965 = vmatpush1.msra.mxu0 0.0
        %966 = vmatprep.subr.mxu0 0.0
        %967 = vmatpush1.msra.mxu0 0.0
        %968 = vmatprep.subr.mxu0 0.0
        %969 = vmatpush1.msra.mxu0 0.0
        %970 = vmatprep.subr.mxu0 0.0
        %971 = vmatpush1.msra.mxu0 0.0
        %972 = vmatprep.subr.mxu0 0.0
        %973 = vmatpush1.msra.mxu0 0.0
        %974 = vmatprep.subr.mxu0 0.0
        %975 = vmatpush1.msra.mxu0 0.0
        %976 = vmatprep.subr.mxu0 0.0
        %977 = vmatpush1.msra.mxu0 0.0
        %978 = vmatprep.subr.mxu0 0.0
        %979 = vmatpush1.msra.mxu0 0.0
        %980 = vmatprep.subr.mxu0 0.0
        %981 = vmatpush1.msra.mxu0 0.0
        %982 = vmatprep.subr.mxu0 0.0
        %983 = vmatpush1.msra.mxu0 0.0
        %984 = vmatprep.subr.mxu0 0.0
        %985 = vmatpush1.msra.mxu0 0.0
        %986 = vmatprep.subr.mxu0 0.0
        %987 = vmatpush1.msra.mxu0 0.0
        %988 = vmatprep.subr.mxu0 0.0
        %989 = vmatpush1.msra.mxu0 0.0
        %990 = vmatprep.subr.mxu0 0.0
        %991 = vmatpush1.msra.mxu0 0.0
        %992 = vmatprep.mubr.f32.mxu0 0.0
        %993 = vmatmul.mubr.f32.gmra.mrb[0].mxu0 %v922
        %v994 = vpop.f32.mrb[0].mxu0
        %v995 = vadd.f32 0.0, %v994
        %v996 = vpop.f32.mrb[0].mxu0
        %v997 = vadd.f32 0.0, %v996
        %998 = vdwg.mxu0
        %999 = vrot.lane.b32.xlu0 %v903, 17
        %v1000 = vpop.permute.xlu0 %999
        %1001 = vrot.lane.b32.xlu0 %v911, 17
        %v1002 = vpop.permute.xlu0 %1001
        %1003 = vrot.lane.b32.xlu0 %v910, 17
        %v1004 = vpop.permute.xlu0 %1003
        %vm1005 = vcmask 138240
        %v1006 = vsel %vm1005, %v1000, %v1002
        %v1007 = vsel %vm1005, %v1002, %v1004
        %v1009 = vsel %vm489, %v892, 0
        %v1011 = vsel %vm493, %v1006, 0
        %v1013 = vsel %vm493, %v1007, 0
        %1015 = vmatprep.subr.mxu0 %v1013
        %1016 = vmatpush1.msra.mxu0 %v1011
        %1017 = vmatprep.subr.mxu0 0.0
        %1018 = vmatpush1.msra.mxu0 0.0
        %1019 = vmatprep.subr.mxu0 0.0
        %1020 = vmatpush1.msra.mxu0 0.0
        %1021 = vmatprep.subr.mxu0 0.0
        %1022 = vmatpush1.msra.mxu0 0.0
        %1023 = vmatprep.subr.mxu0 0.0
        %1024 = vmatpush1.msra.mxu0 0.0
        %1025 = vmatprep.subr.mxu0 0.0
        %1026 = vmatpush1.msra.mxu0 0.0
        %1027 = vmatprep.subr.mxu0 0.0
        %1028 = vmatpush1.msra.mxu0 0.0
        %1029 = vmatprep.subr.mxu0 0.0
        %1030 = vmatpush1.msra.mxu0 0.0
        %1031 = vmatprep.subr.mxu0 0.0
        %1032 = vmatpush1.msra.mxu0 0.0
        %1033 = vmatprep.subr.mxu0 0.0
        %1034 = vmatpush1.msra.mxu0 0.0
        %1035 = vmatprep.subr.mxu0 0.0
        %1036 = vmatpush1.msra.mxu0 0.0
        %1037 = vmatprep.subr.mxu0 0.0
        %1038 = vmatpush1.msra.mxu0 0.0
        %1039 = vmatprep.subr.mxu0 0.0
        %1040 = vmatpush1.msra.mxu0 0.0
        %1041 = vmatprep.subr.mxu0 0.0
        %1042 = vmatpush1.msra.mxu0 0.0
        %1043 = vmatprep.subr.mxu0 0.0
        %1044 = vmatpush1.msra.mxu0 0.0
        %1045 = vmatprep.subr.mxu0 0.0
        %1046 = vmatpush1.msra.mxu0 0.0
        %1047 = vmatprep.subr.mxu0 0.0
        %1048 = vmatpush1.msra.mxu0 0.0
        %1049 = vmatprep.subr.mxu0 0.0
        %1050 = vmatpush1.msra.mxu0 0.0
        %1051 = vmatprep.subr.mxu0 0.0
        %1052 = vmatpush1.msra.mxu0 0.0
        %1053 = vmatprep.subr.mxu0 0.0
        %1054 = vmatpush1.msra.mxu0 0.0
        %1055 = vmatprep.subr.mxu0 0.0
        %1056 = vmatpush1.msra.mxu0 0.0
        %1057 = vmatprep.subr.mxu0 0.0
        %1058 = vmatpush1.msra.mxu0 0.0
        %1059 = vmatprep.subr.mxu0 0.0
        %1060 = vmatpush1.msra.mxu0 0.0
        %1061 = vmatprep.subr.mxu0 0.0
        %1062 = vmatpush1.msra.mxu0 0.0
        %1063 = vmatprep.subr.mxu0 0.0
        %1064 = vmatpush1.msra.mxu0 0.0
        %1065 = vmatprep.subr.mxu0 0.0
        %1066 = vmatpush1.msra.mxu0 0.0
        %1067 = vmatprep.subr.mxu0 0.0
        %1068 = vmatpush1.msra.mxu0 0.0
        %1069 = vmatprep.subr.mxu0 0.0
        %1070 = vmatpush1.msra.mxu0 0.0
        %1071 = vmatprep.subr.mxu0 0.0
        %1072 = vmatpush1.msra.mxu0 0.0
        %1073 = vmatprep.subr.mxu0 0.0
        %1074 = vmatpush1.msra.mxu0 0.0
        %1075 = vmatprep.subr.mxu0 0.0
        %1076 = vmatpush1.msra.mxu0 0.0
        %1077 = vmatprep.subr.mxu0 0.0
        %1078 = vmatpush1.msra.mxu0 0.0
        %1079 = vmatprep.mubr.f32.mxu0 0.0
        %1080 = vmatmul.mubr.f32.gmra.mrb[0].mxu0 %v1009
        %v1081 = vpop.f32.mrb[0].mxu0
        %v1082 = vadd.f32 %v995, %v1081
        %v1083 = vpop.f32.mrb[0].mxu0
        %v1084 = vadd.f32 %v997, %v1083
        %1085 = vdwg.mxu0
        %v1086 = vld [vmem:[#allocation2 + $0x2] sm:$0x3f]
        %s1087 = scalar_lea.vmem %s7, 12
        %v1088 = vld [vmem:[%s1087] sm:$0x3]
        %v1090 = vcombine.high %v1086, %v1086
        %v1092 = vunpack.c.l.s4 1983009808
        %v1093 = vunpack.c.0.s8 %v1092
        %v1094 = vlaneseq
        %v1095 = vshrl.u32 %v1094, 7
        %v1096 = vsub.s32 %v1093, %v1095
        %v1097 = vrot.slane %v1086, %v1096
        %v1099 = vunpack.c.l.s4 1983009808
        %v1100 = vunpack.c.0.s8 %v1099
        %v1101 = vlaneseq
        %v1102 = vshrl.u32 %v1101, 7
        %v1103 = vsub.s32 %v1100, %v1102
        %v1104 = vrot.slane %v1090, %v1103
        %v1105 = vcombine.high %v1097, %v1097
        %1106 = vrot.lane.b32.xlu0 %v1097, 113
        %v1107 = vpop.permute.xlu0 %1106
        %1108 = vrot.lane.b32.xlu0 %v1105, 113
        %v1109 = vpop.permute.xlu0 %1108
        %1110 = vrot.lane.b32.xlu0 %v1104, 113
        %v1111 = vpop.permute.xlu0 %1110
        %vm1112 = vcmask 924672
        %v1113 = vsel %vm1112, %v1107, %v1109
        %v1114 = vsel %vm1112, %v1109, %v1111
        %v1116 = vsel %vm489, %v1088, 0
        %v1118 = vsel %vm493, %v1113, 0
        %v1120 = vsel %vm493, %v1114, 0
        %1122 = vmatprep.subr.mxu0 %v1120
        %1123 = vmatpush1.msra.mxu0 %v1118
        %1124 = vmatprep.subr.mxu0 0.0
        %1125 = vmatpush1.msra.mxu0 0.0
        %1126 = vmatprep.subr.mxu0 0.0
        %1127 = vmatpush1.msra.mxu0 0.0
        %1128 = vmatprep.subr.mxu0 0.0
        %1129 = vmatpush1.msra.mxu0 0.0
        %1130 = vmatprep.subr.mxu0 0.0
        %1131 = vmatpush1.msra.mxu0 0.0
        %1132 = vmatprep.subr.mxu0 0.0
        %1133 = vmatpush1.msra.mxu0 0.0
        %1134 = vmatprep.subr.mxu0 0.0
        %1135 = vmatpush1.msra.mxu0 0.0
        %1136 = vmatprep.subr.mxu0 0.0
        %1137 = vmatpush1.msra.mxu0 0.0
        %1138 = vmatprep.subr.mxu0 0.0
        %1139 = vmatpush1.msra.mxu0 0.0
        %1140 = vmatprep.subr.mxu0 0.0
        %1141 = vmatpush1.msra.mxu0 0.0
        %1142 = vmatprep.subr.mxu0 0.0
        %1143 = vmatpush1.msra.mxu0 0.0
        %1144 = vmatprep.subr.mxu0 0.0
        %1145 = vmatpush1.msra.mxu0 0.0
        %1146 = vmatprep.subr.mxu0 0.0
        %1147 = vmatpush1.msra.mxu0 0.0
        %1148 = vmatprep.subr.mxu0 0.0
        %1149 = vmatpush1.msra.mxu0 0.0
        %1150 = vmatprep.subr.mxu0 0.0
        %1151 = vmatpush1.msra.mxu0 0.0
        %1152 = vmatprep.subr.mxu0 0.0
        %1153 = vmatpush1.msra.mxu0 0.0
        %1154 = vmatprep.subr.mxu0 0.0
        %1155 = vmatpush1.msra.mxu0 0.0
        %1156 = vmatprep.subr.mxu0 0.0
        %1157 = vmatpush1.msra.mxu0 0.0
        %1158 = vmatprep.subr.mxu0 0.0
        %1159 = vmatpush1.msra.mxu0 0.0
        %1160 = vmatprep.subr.mxu0 0.0
        %1161 = vmatpush1.msra.mxu0 0.0
        %1162 = vmatprep.subr.mxu0 0.0
        %1163 = vmatpush1.msra.mxu0 0.0
        %1164 = vmatprep.subr.mxu0 0.0
        %1165 = vmatpush1.msra.mxu0 0.0
        %1166 = vmatprep.subr.mxu0 0.0
        %1167 = vmatpush1.msra.mxu0 0.0
        %1168 = vmatprep.subr.mxu0 0.0
        %1169 = vmatpush1.msra.mxu0 0.0
        %1170 = vmatprep.subr.mxu0 0.0
        %1171 = vmatpush1.msra.mxu0 0.0
        %1172 = vmatprep.subr.mxu0 0.0
        %1173 = vmatpush1.msra.mxu0 0.0
        %1174 = vmatprep.subr.mxu0 0.0
        %1175 = vmatpush1.msra.mxu0 0.0
        %1176 = vmatprep.subr.mxu0 0.0
        %1177 = vmatpush1.msra.mxu0 0.0
        %1178 = vmatprep.subr.mxu0 0.0
        %1179 = vmatpush1.msra.mxu0 0.0
        %1180 = vmatprep.subr.mxu0 0.0
        %1181 = vmatpush1.msra.mxu0 0.0
        %1182 = vmatprep.subr.mxu0 0.0
        %1183 = vmatpush1.msra.mxu0 0.0
        %1184 = vmatprep.subr.mxu0 0.0
        %1185 = vmatpush1.msra.mxu0 0.0
        %1186 = vmatprep.mubr.f32.mxu0 0.0
        %1187 = vmatmul.mubr.f32.gmra.mrb[0].mxu0 %v1116
        %v1188 = vpop.f32.mrb[0].mxu0
        %v1189 = vadd.f32 0.0, %v1188
        %v1190 = vpop.f32.mrb[0].mxu0
        %v1191 = vadd.f32 0.0, %v1190
        %1192 = vdwg.mxu0
        %v1193 = vadd.f32 %v1082, %v1189
        %v1194 = vadd.f32 %v1084, %v1191
        %v1195 = vld [vmem:[#allocation2] sm:$0x3f]
        %s1196 = scalar_lea.vmem %s7, 4
        %v1197 = vld [vmem:[%s1196] sm:$0x3]
        %v1198 = vld [vmem:[#allocation2 + $0x2] sm:$0x3f]
        %s1199 = scalar_lea.vmem %s7, 10
        %v1200 = vld [vmem:[%s1199] sm:$0x3]
        %v1202 = vcombine.high %v1198, %v1198
        %v1204 = vunpack.c.l.s4 1983009808
        %v1205 = vunpack.c.0.s8 %v1204
        %v1206 = vlaneseq
        %v1207 = vshrl.u32 %v1206, 7
        %v1208 = vsub.s32 %v1205, %v1207
        %v1209 = vrot.slane %v1198, %v1208
        %v1211 = vunpack.c.l.s4 1983009808
        %v1212 = vunpack.c.0.s8 %v1211
        %v1213 = vlaneseq
        %v1214 = vshrl.u32 %v1213, 7
        %v1215 = vsub.s32 %v1212, %v1214
        %v1216 = vrot.slane %v1202, %v1215
        %v1217 = vcombine.high %v1209, %v1209
        %1218 = vrot.lane.b32.xlu0 %v1209, 127
        %v1219 = vpop.permute.xlu0 %1218
        %1220 = vrot.lane.b32.xlu0 %v1217, 127
        %v1221 = vpop.permute.xlu0 %1220
        %1222 = vrot.lane.b32.xlu0 %v1216, 127
        %v1223 = vpop.permute.xlu0 %1222
        %vm1224 = vcmask 1039360
        %v1225 = vsel %vm1224, %v1219, %v1221
        %v1226 = vsel %vm1224, %v1221, %v1223
        %v1228 = vsel %vm489, %v1200, 0
        %v1230 = vsel %vm493, %v1225, 0
        %v1232 = vsel %vm493, %v1226, 0
        %1234 = vmatprep.subr.mxu0 %v1232
        %1235 = vmatpush1.msra.mxu0 %v1230
        %1236 = vmatprep.subr.mxu0 0.0
        %1237 = vmatpush1.msra.mxu0 0.0
        %1238 = vmatprep.subr.mxu0 0.0
        %1239 = vmatpush1.msra.mxu0 0.0
        %1240 = vmatprep.subr.mxu0 0.0
        %1241 = vmatpush1.msra.mxu0 0.0
        %1242 = vmatprep.subr.mxu0 0.0
        %1243 = vmatpush1.msra.mxu0 0.0
        %1244 = vmatprep.subr.mxu0 0.0
        %1245 = vmatpush1.msra.mxu0 0.0
        %1246 = vmatprep.subr.mxu0 0.0
        %1247 = vmatpush1.msra.mxu0 0.0
        %1248 = vmatprep.subr.mxu0 0.0
        %1249 = vmatpush1.msra.mxu0 0.0
        %1250 = vmatprep.subr.mxu0 0.0
        %1251 = vmatpush1.msra.mxu0 0.0
        %1252 = vmatprep.subr.mxu0 0.0
        %1253 = vmatpush1.msra.mxu0 0.0
        %1254 = vmatprep.subr.mxu0 0.0
        %1255 = vmatpush1.msra.mxu0 0.0
        %1256 = vmatprep.subr.mxu0 0.0
        %1257 = vmatpush1.msra.mxu0 0.0
        %1258 = vmatprep.subr.mxu0 0.0
        %1259 = vmatpush1.msra.mxu0 0.0
        %1260 = vmatprep.subr.mxu0 0.0
        %1261 = vmatpush1.msra.mxu0 0.0
        %1262 = vmatprep.subr.mxu0 0.0
        %1263 = vmatpush1.msra.mxu0 0.0
        %1264 = vmatprep.subr.mxu0 0.0
        %1265 = vmatpush1.msra.mxu0 0.0
        %1266 = vmatprep.subr.mxu0 0.0
        %1267 = vmatpush1.msra.mxu0 0.0
        %1268 = vmatprep.subr.mxu0 0.0
        %1269 = vmatpush1.msra.mxu0 0.0
        %1270 = vmatprep.subr.mxu0 0.0
        %1271 = vmatpush1.msra.mxu0 0.0
        %1272 = vmatprep.subr.mxu0 0.0
        %1273 = vmatpush1.msra.mxu0 0.0
        %1274 = vmatprep.subr.mxu0 0.0
        %1275 = vmatpush1.msra.mxu0 0.0
        %1276 = vmatprep.subr.mxu0 0.0
        %1277 = vmatpush1.msra.mxu0 0.0
        %1278 = vmatprep.subr.mxu0 0.0
        %1279 = vmatpush1.msra.mxu0 0.0
        %1280 = vmatprep.subr.mxu0 0.0
        %1281 = vmatpush1.msra.mxu0 0.0
        %1282 = vmatprep.subr.mxu0 0.0
        %1283 = vmatpush1.msra.mxu0 0.0
        %1284 = vmatprep.subr.mxu0 0.0
        %1285 = vmatpush1.msra.mxu0 0.0
        %1286 = vmatprep.subr.mxu0 0.0
        %1287 = vmatpush1.msra.mxu0 0.0
        %1288 = vmatprep.subr.mxu0 0.0
        %1289 = vmatpush1.msra.mxu0 0.0
        %1290 = vmatprep.subr.mxu0 0.0
        %1291 = vmatpush1.msra.mxu0 0.0
        %1292 = vmatprep.subr.mxu0 0.0
        %1293 = vmatpush1.msra.mxu0 0.0
        %1294 = vmatprep.subr.mxu0 0.0
        %1295 = vmatpush1.msra.mxu0 0.0
        %1296 = vmatprep.subr.mxu0 0.0
        %1297 = vmatpush1.msra.mxu0 0.0
        %1298 = vmatprep.mubr.f32.mxu0 0.0
        %1299 = vmatmul.mubr.f32.gmra.mrb[0].mxu0 %v1228
        %v1300 = vpop.f32.mrb[0].mxu0
        %v1301 = vadd.f32 0.0, %v1300
        %v1302 = vpop.f32.mrb[0].mxu0
        %v1303 = vadd.f32 0.0, %v1302
        %1304 = vdwg.mxu0
        %v1306 = vcombine.high %v1195, %v1195
        %v1308 = vunpack.c.l.s4 1983009808
        %v1309 = vunpack.c.0.s8 %v1308
        %v1310 = vlaneseq
        %v1311 = vshrl.u32 %v1310, 7
        %v1312 = vsub.s32 %v1309, %v1311
        %v1313 = vrot.slane %v1195, %v1312
        %v1315 = vunpack.c.l.s4 1983009808
        %v1316 = vunpack.c.0.s8 %v1315
        %v1317 = vlaneseq
        %v1318 = vshrl.u32 %v1317, 7
        %v1319 = vsub.s32 %v1316, %v1318
        %v1320 = vrot.slane %v1306, %v1319
        %v1321 = vcombine.high %v1313, %v1313
        %1322 = vrot.lane.b32.xlu0 %v1313, 15
        %v1323 = vpop.permute.xlu0 %1322
        %1324 = vrot.lane.b32.xlu0 %v1321, 15
        %v1325 = vpop.permute.xlu0 %1324
        %1326 = vrot.lane.b32.xlu0 %v1320, 15
        %v1327 = vpop.permute.xlu0 %1326
        %vm1328 = vcmask 121856
        %v1329 = vsel %vm1328, %v1323, %v1325
        %v1330 = vsel %vm1328, %v1325, %v1327
        %v1332 = vsel %vm489, %v1197, 0
        %v1334 = vsel %vm493, %v1329, 0
        %v1336 = vsel %vm493, %v1330, 0
        %1338 = vmatprep.subr.mxu0 %v1336
        %1339 = vmatpush1.msra.mxu0 %v1334
        %1340 = vmatprep.subr.mxu0 0.0
        %1341 = vmatpush1.msra.mxu0 0.0
        %1342 = vmatprep.subr.mxu0 0.0
        %1343 = vmatpush1.msra.mxu0 0.0
        %1344 = vmatprep.subr.mxu0 0.0
        %1345 = vmatpush1.msra.mxu0 0.0
        %1346 = vmatprep.subr.mxu0 0.0
        %1347 = vmatpush1.msra.mxu0 0.0
        %1348 = vmatprep.subr.mxu0 0.0
        %1349 = vmatpush1.msra.mxu0 0.0
        %1350 = vmatprep.subr.mxu0 0.0
        %1351 = vmatpush1.msra.mxu0 0.0
        %1352 = vmatprep.subr.mxu0 0.0
        %1353 = vmatpush1.msra.mxu0 0.0
        %1354 = vmatprep.subr.mxu0 0.0
        %1355 = vmatpush1.msra.mxu0 0.0
        %1356 = vmatprep.subr.mxu0 0.0
        %1357 = vmatpush1.msra.mxu0 0.0
        %1358 = vmatprep.subr.mxu0 0.0
        %1359 = vmatpush1.msra.mxu0 0.0
        %1360 = vmatprep.subr.mxu0 0.0
        %1361 = vmatpush1.msra.mxu0 0.0
        %1362 = vmatprep.subr.mxu0 0.0
        %1363 = vmatpush1.msra.mxu0 0.0
        %1364 = vmatprep.subr.mxu0 0.0
        %1365 = vmatpush1.msra.mxu0 0.0
        %1366 = vmatprep.subr.mxu0 0.0
        %1367 = vmatpush1.msra.mxu0 0.0
        %1368 = vmatprep.subr.mxu0 0.0
        %1369 = vmatpush1.msra.mxu0 0.0
        %1370 = vmatprep.subr.mxu0 0.0
        %1371 = vmatpush1.msra.mxu0 0.0
        %1372 = vmatprep.subr.mxu0 0.0
        %1373 = vmatpush1.msra.mxu0 0.0
        %1374 = vmatprep.subr.mxu0 0.0
        %1375 = vmatpush1.msra.mxu0 0.0
        %1376 = vmatprep.subr.mxu0 0.0
        %1377 = vmatpush1.msra.mxu0 0.0
        %1378 = vmatprep.subr.mxu0 0.0
        %1379 = vmatpush1.msra.mxu0 0.0
        %1380 = vmatprep.subr.mxu0 0.0
        %1381 = vmatpush1.msra.mxu0 0.0
        %1382 = vmatprep.subr.mxu0 0.0
        %1383 = vmatpush1.msra.mxu0 0.0
        %1384 = vmatprep.subr.mxu0 0.0
        %1385 = vmatpush1.msra.mxu0 0.0
        %1386 = vmatprep.subr.mxu0 0.0
        %1387 = vmatpush1.msra.mxu0 0.0
        %1388 = vmatprep.subr.mxu0 0.0
        %1389 = vmatpush1.msra.mxu0 0.0
        %1390 = vmatprep.subr.mxu0 0.0
        %1391 = vmatpush1.msra.mxu0 0.0
        %1392 = vmatprep.subr.mxu0 0.0
        %1393 = vmatpush1.msra.mxu0 0.0
        %1394 = vmatprep.subr.mxu0 0.0
        %1395 = vmatpush1.msra.mxu0 0.0
        %1396 = vmatprep.subr.mxu0 0.0
        %1397 = vmatpush1.msra.mxu0 0.0
        %1398 = vmatprep.subr.mxu0 0.0
        %1399 = vmatpush1.msra.mxu0 0.0
        %1400 = vmatprep.subr.mxu0 0.0
        %1401 = vmatpush1.msra.mxu0 0.0
        %1402 = vmatprep.mubr.f32.mxu0 0.0
        %1403 = vmatmul.mubr.f32.gmra.mrb[0].mxu0 %v1332
        %v1404 = vpop.f32.mrb[0].mxu0
        %v1405 = vadd.f32 %v1301, %v1404
        %v1406 = vpop.f32.mrb[0].mxu0
        %v1407 = vadd.f32 %v1303, %v1406
        %1408 = vdwg.mxu0
        %v1409 = vld [vmem:[#allocation2 + $0x2] sm:$0x3f]
        %s1410 = scalar_lea.vmem %s7, 16
        %v1411 = vld [vmem:[%s1410] sm:$0x3]
        %v1413 = vcombine.high %v1409, %v1409
        %v1415 = vunpack.c.l.s4 1983009808
        %v1416 = vunpack.c.0.s8 %v1415
        %v1417 = vlaneseq
        %v1418 = vshrl.u32 %v1417, 7
        %v1419 = vsub.s32 %v1416, %v1418
        %v1420 = vrot.slane %v1409, %v1419
        %v1422 = vunpack.c.l.s4 1983009808
        %v1423 = vunpack.c.0.s8 %v1422
        %v1424 = vlaneseq
        %v1425 = vshrl.u32 %v1424, 7
        %v1426 = vsub.s32 %v1423, %v1425
        %v1427 = vrot.slane %v1413, %v1426
        %v1428 = vcombine.high %v1420, %v1420
        %1429 = vrot.lane.b32.xlu0 %v1420, 111
        %v1430 = vpop.permute.xlu0 %1429
        %1431 = vrot.lane.b32.xlu0 %v1428, 111
        %v1432 = vpop.permute.xlu0 %1431
        %1433 = vrot.lane.b32.xlu0 %v1427, 111
        %v1434 = vpop.permute.xlu0 %1433
        %vm1435 = vcmask 908288
        %v1436 = vsel %vm1435, %v1430, %v1432
        %v1437 = vsel %vm1435, %v1432, %v1434
        %v1439 = vsel %vm489, %v1411, 0
        %v1441 = vsel %vm493, %v1436, 0
        %v1443 = vsel %vm493, %v1437, 0
        %1445 = vmatprep.subr.mxu0 %v1443
        %1446 = vmatpush1.msra.mxu0 %v1441
        %1447 = vmatprep.subr.mxu0 0.0
        %1448 = vmatpush1.msra.mxu0 0.0
        %1449 = vmatprep.subr.mxu0 0.0
        %1450 = vmatpush1.msra.mxu0 0.0
        %1451 = vmatprep.subr.mxu0 0.0
        %1452 = vmatpush1.msra.mxu0 0.0
        %1453 = vmatprep.subr.mxu0 0.0
        %1454 = vmatpush1.msra.mxu0 0.0
        %1455 = vmatprep.subr.mxu0 0.0
        %1456 = vmatpush1.msra.mxu0 0.0
        %1457 = vmatprep.subr.mxu0 0.0
        %1458 = vmatpush1.msra.mxu0 0.0
        %1459 = vmatprep.subr.mxu0 0.0
        %1460 = vmatpush1.msra.mxu0 0.0
        %1461 = vmatprep.subr.mxu0 0.0
        %1462 = vmatpush1.msra.mxu0 0.0
        %1463 = vmatprep.subr.mxu0 0.0
        %1464 = vmatpush1.msra.mxu0 0.0
        %1465 = vmatprep.subr.mxu0 0.0
        %1466 = vmatpush1.msra.mxu0 0.0
        %1467 = vmatprep.subr.mxu0 0.0
        %1468 = vmatpush1.msra.mxu0 0.0
        %1469 = vmatprep.subr.mxu0 0.0
        %1470 = vmatpush1.msra.mxu0 0.0
        %1471 = vmatprep.subr.mxu0 0.0
        %1472 = vmatpush1.msra.mxu0 0.0
        %1473 = vmatprep.subr.mxu0 0.0
        %1474 = vmatpush1.msra.mxu0 0.0
        %1475 = vmatprep.subr.mxu0 0.0
        %1476 = vmatpush1.msra.mxu0 0.0
        %1477 = vmatprep.subr.mxu0 0.0
        %1478 = vmatpush1.msra.mxu0 0.0
        %1479 = vmatprep.subr.mxu0 0.0
        %1480 = vmatpush1.msra.mxu0 0.0
        %1481 = vmatprep.subr.mxu0 0.0
        %1482 = vmatpush1.msra.mxu0 0.0
        %1483 = vmatprep.subr.mxu0 0.0
        %1484 = vmatpush1.msra.mxu0 0.0
        %1485 = vmatprep.subr.mxu0 0.0
        %1486 = vmatpush1.msra.mxu0 0.0
        %1487 = vmatprep.subr.mxu0 0.0
        %1488 = vmatpush1.msra.mxu0 0.0
        %1489 = vmatprep.subr.mxu0 0.0
        %1490 = vmatpush1.msra.mxu0 0.0
        %1491 = vmatprep.subr.mxu0 0.0
        %1492 = vmatpush1.msra.mxu0 0.0
        %1493 = vmatprep.subr.mxu0 0.0
        %1494 = vmatpush1.msra.mxu0 0.0
        %1495 = vmatprep.subr.mxu0 0.0
        %1496 = vmatpush1.msra.mxu0 0.0
        %1497 = vmatprep.subr.mxu0 0.0
        %1498 = vmatpush1.msra.mxu0 0.0
        %1499 = vmatprep.subr.mxu0 0.0
        %1500 = vmatpush1.msra.mxu0 0.0
        %1501 = vmatprep.subr.mxu0 0.0
        %1502 = vmatpush1.msra.mxu0 0.0
        %1503 = vmatprep.subr.mxu0 0.0
        %1504 = vmatpush1.msra.mxu0 0.0
        %1505 = vmatprep.subr.mxu0 0.0
        %1506 = vmatpush1.msra.mxu0 0.0
        %1507 = vmatprep.subr.mxu0 0.0
        %1508 = vmatpush1.msra.mxu0 0.0
        %1509 = vmatprep.mubr.f32.mxu0 0.0
        %1510 = vmatmul.mubr.f32.gmra.mrb[0].mxu0 %v1439
        %v1511 = vpop.f32.mrb[0].mxu0
        %v1512 = vadd.f32 0.0, %v1511
        %v1513 = vpop.f32.mrb[0].mxu0
        %v1514 = vadd.f32 0.0, %v1513
        %1515 = vdwg.mxu0
        %v1516 = vadd.f32 %v1405, %v1512
        %v1517 = vadd.f32 %v1407, %v1514
        %v1518 = vmul.f32 %v471, %v1193
        %v1519 = vmul.f32 %v472, %v1194
        %v1520 = vadd.f32 %v889, %v1518
        %v1521 = vadd.f32 %v890, %v1519
        %v1522 = vmul.f32 %v477, %v1516
        %v1523 = vmul.f32 %v478, %v1517
        %v1524 = vadd.f32 %v1520, %v1522
        %v1525 = vadd.f32 %v1521, %v1523
        %1527 = vset.pattern.permute.xlu0 0
        %1528 = vperm.xlu0 %1527, %v483
        %v1529 = vpop.permute.xlu0 %1528
        %v1531 = vadd.f32 %v1524, %v1529
        %v1532 = vadd.f32 %v1525, %v1529
        %v1533 = vxor.u32 %v1531, 2147483648
        %v1534 = vxor.u32 %v1532, 2147483648
        %v1535 = vmul.f32 %v1533, 1.442695
        %v1536 = vpow.pop %v1535
        %v1537 = vmul.f32 %v1534, 1.442695
        %v1538 = vpow.pop %v1537
        %v1539 = vadd.f32 %v1536, 1.0
        %v1540 = vadd.f32 %v1538, 1.0
        %v1541 = vrcp.pop %v1539
        %v1542 = vmul.f32 1.0, %v1541
        %v1543 = vrcp.pop %v1540
        %v1544 = vmul.f32 1.0, %v1543
        %v1545 = vmul.f32 %v1531, %v1542
        %v1546 = vmul.f32 %v1532, %v1544
        %v1547 = vadd.f32 %v433, %v1545
        %v1548 = vadd.f32 %v434, %v1546
        %v1551 = vcombine.low %v1547, %v1548
        %1553 = vst [vmem:[#allocation3] sm:$0x33] %v1551
        %v1554 = vld [vmem:[%s3] sm:$0xf]
        %v1555 = vld [vmem:[#allocation3] sm:$0xff]
        %v1556 = vld [vmem:[%s4] sm:$0xf]
        %1558 = vset.pattern.permute.xlu0 0
        %1559 = vperm.xlu0 %1558, %v1556
        %v1560 = vpop.permute.xlu0 %1559
        %v1563 = vcombine.high %v1555, %v1555
        %v1565 = vsel %vm341, %v1554, 0
        %v1567 = vsel %vm345, %v1555, 0
        %v1569 = vsel %vm345, %v1563, 0
        %1571 = vmatprep.subr.mxu0 %v1569
        %1572 = vmatpush1.msra.mxu0 %v1567
        %1573 = vmatprep.subr.mxu0 0.0
        %1574 = vmatpush1.msra.mxu0 0.0
        %1575 = vmatprep.subr.mxu0 0.0
        %1576 = vmatpush1.msra.mxu0 0.0
        %1577 = vmatprep.subr.mxu0 0.0
        %1578 = vmatpush1.msra.mxu0 0.0
        %1579 = vmatprep.subr.mxu0 0.0
        %1580 = vmatpush1.msra.mxu0 0.0
        %1581 = vmatprep.subr.mxu0 0.0
        %1582 = vmatpush1.msra.mxu0 0.0
        %1583 = vmatprep.subr.mxu0 0.0
        %1584 = vmatpush1.msra.mxu0 0.0
        %1585 = vmatprep.subr.mxu0 0.0
        %1586 = vmatpush1.msra.mxu0 0.0
        %1587 = vmatprep.subr.mxu0 0.0
        %1588 = vmatpush1.msra.mxu0 0.0
        %1589 = vmatprep.subr.mxu0 0.0
        %1590 = vmatpush1.msra.mxu0 0.0
        %1591 = vmatprep.subr.mxu0 0.0
        %1592 = vmatpush1.msra.mxu0 0.0
        %1593 = vmatprep.subr.mxu0 0.0
        %1594 = vmatpush1.msra.mxu0 0.0
        %1595 = vmatprep.subr.mxu0 0.0
        %1596 = vmatpush1.msra.mxu0 0.0
        %1597 = vmatprep.subr.mxu0 0.0
        %1598 = vmatpush1.msra.mxu0 0.0
        %1599 = vmatprep.subr.mxu0 0.0
        %1600 = vmatpush1.msra.mxu0 0.0
        %1601 = vmatprep.subr.mxu0 0.0
        %1602 = vmatpush1.msra.mxu0 0.0
        %1603 = vmatprep.subr.mxu0 0.0
        %1604 = vmatpush1.msra.mxu0 0.0
        %1605 = vmatprep.subr.mxu0 0.0
        %1606 = vmatpush1.msra.mxu0 0.0
        %1607 = vmatprep.subr.mxu0 0.0
        %1608 = vmatpush1.msra.mxu0 0.0
        %1609 = vmatprep.subr.mxu0 0.0
        %1610 = vmatpush1.msra.mxu0 0.0
        %1611 = vmatprep.subr.mxu0 0.0
        %1612 = vmatpush1.msra.mxu0 0.0
        %1613 = vmatprep.subr.mxu0 0.0
        %1614 = vmatpush1.msra.mxu0 0.0
        %1615 = vmatprep.subr.mxu0 0.0
        %1616 = vmatpush1.msra.mxu0 0.0
        %1617 = vmatprep.subr.mxu0 0.0
        %1618 = vmatpush1.msra.mxu0 0.0
        %1619 = vmatprep.subr.mxu0 0.0
        %1620 = vmatpush1.msra.mxu0 0.0
        %1621 = vmatprep.subr.mxu0 0.0
        %1622 = vmatpush1.msra.mxu0 0.0
        %1623 = vmatprep.subr.mxu0 0.0
        %1624 = vmatpush1.msra.mxu0 0.0
        %1625 = vmatprep.subr.mxu0 0.0
        %1626 = vmatpush1.msra.mxu0 0.0
        %1627 = vmatprep.subr.mxu0 0.0
        %1628 = vmatpush1.msra.mxu0 0.0
        %1629 = vmatprep.subr.mxu0 0.0
        %1630 = vmatpush1.msra.mxu0 0.0
        %1631 = vmatprep.subr.mxu0 0.0
        %1632 = vmatpush1.msra.mxu0 0.0
        %1633 = vmatprep.subr.mxu0 0.0
        %1634 = vmatpush1.msra.mxu0 0.0
        %1635 = vmatprep.mubr.f32.mxu0 0.0
        %1636 = vmatmul.mubr.f32.gmra.mrb[0].mxu0 %v1565
        %v1637 = vpop.f32.mrb[0].mxu0
        %v1638 = vadd.f32 %v1560, %v1637
        %v1639 = vpop.f32.mrb[0].mxu0
        %v1640 = vadd.f32 %v1560, %v1639
        %1641 = vdwg.mxu0
        %v1642 = vxor.u32 %v1638, 2147483648
        %v1643 = vxor.u32 %v1640, 2147483648
        %v1644 = vmul.f32 %v1642, 1.442695
        %v1645 = vpow.pop %v1644
        %v1646 = vmul.f32 %v1643, 1.442695
        %v1647 = vpow.pop %v1646
        %v1648 = vadd.f32 %v1645, 1.0
        %v1649 = vadd.f32 %v1647, 1.0
        %v1650 = vrcp.pop %v1648
        %v1651 = vmul.f32 1.0, %v1650
        %v1652 = vrcp.pop %v1649
        %v1653 = vmul.f32 1.0, %v1652
        %v1654 = vmul.f32 %v1638, %v1651
        %v1655 = vmul.f32 %v1640, %v1653
        %v1658 = vcombine.low %v1654, %v1655
        %1660 = vst [vmem:[%s325] sm:$0xff] %v1658
        %s1661 = sand.u32 %s225, 1
        %s1662 = scalar_lea.sflag [#allocation5], %s1661
        %s1663 = sand.u32 %s225, 1
        %s1664 = smul.addr %s1663, 8
        %s1665 = scalar_lea.vmem [#allocation4], %s1664
        // Predicated region
        $region57: #{tpu_custom_call.1} parent=55 // pred_check
          %p1666 = pneg %p235
        $region58: #{tpu_custom_call.1} parent=55 // pred_check_branch
          %1668 = sbr.rel (%p1666) target = $region60
        $region59: #{tpu_custom_call.1} parent=55 // pred_region
          %s1670 = ssub.s32 128, 128
          %1671 = vsyncadd %s1662, %s1670
          %s1672 = smul.addr %s23, 2
          %s1673 = smul.addr %s1672, 64
          %s1674 = scalar_lea.hbm %s9, %s1673
          %s1676 = sshll.u32 %s1665, 4
          %s1677 = int_to_ptr.vmem [resolvable:$true] %s1676
          %1679 = dma.vmem_to_hbm [thread:$0]  %s1677, 128, %s1674, %s1662
        $region60: #{tpu_custom_call.1} parent=55 // pred_fallthru
          _
      $region56: #{tpu_custom_call.1} parent=5 // pred_fallthru
        _
      %p1680 = scmp.le.s32.totalorder 2, %s18
      // Predicated region
      $region61: #{tpu_custom_call.1} parent=5 // pred_check
        %p1681 = pneg %p1680
      $region62: #{tpu_custom_call.1} parent=5 // pred_check_branch
        %1683 = sbr.rel (%p1681) target = $region64
      $region63: #{tpu_custom_call.1} parent=5 // pred_region
        %s1684 = ssub.s32 %s18, 2
        // Predicated region
        $region65: #{tpu_custom_call.1} parent=63 // pred_check
          %p1685 = pneg %p241
        $region66: #{tpu_custom_call.1} parent=63 // pred_check_branch
          %1687 = sbr.rel (%p1685) target = $region68
        $region67: #{tpu_custom_call.1} parent=63 // pred_region
          %s1688 = sand.u32 %s226, 1
          %s1689 = scalar_lea.sflag [#allocation5], %s1688
          %s1690 = sand.u32 %s226, 1
          %s1691 = smul.addr %s1690, 8
          %s1692 = scalar_lea.vmem [#allocation4], %s1691
          %1693 = dma.done %s1689, 128
        $region68: #{tpu_custom_call.1} parent=63 // pred_fallthru
          _
      $region64: #{tpu_custom_call.1} parent=5 // pred_fallthru
        _
    $region6: #{tpu_custom_call.1} parent=1 // loop_footer
      %s22 = sadd.s32 1, %s18
    $region7: #{tpu_custom_call.1} parent=1 // loop_footer_branch
      %17 = sbr.rel target = $region3
    $region8: #{tpu_custom_call.1} parent=1 // loop_exit
      _
    %1694 = vsyncpa [#allocation5], 1
    %s1695 = scalar_lea.sflag [#allocation5], 1
    %1696 = vsyncpa %s1695, 1

</llo_original>
